<compile_context>
chip_gen: v6e
topology: v6e:2x2x1
jax: 0.10.0
libtpu: 0.0.40
codegen_flags: <defaults>
</compile_context>

<pallas_src>
import jax
import jax.numpy as jnp
from jax import lax
from jax.experimental import pallas as pl
from jax.experimental.pallas import tpu as pltpu

BN_EPS = 1e-5  # PyTorch BatchNorm1d default


def _full_spec(shape):
    """Full-array VMEM BlockSpec for a 1-point grid."""
    return pl.BlockSpec(shape, lambda i: (0,) * len(shape))


# ----------------------------------------------------------------------------
# Fused MLP kernel (num_layers >= 2): all Linear / BatchNorm / ReLU stages
# chained in one body, all weights resident in VMEM for the duration of the call.
# ----------------------------------------------------------------------------
def _make_fused_mlp_kernel(num_layers):
    """Ref order: x, [W_i(bf16), b_i, gamma_i, beta_i] * (num_layers-1),
    W_last(bf16), b_last, out."""

    def kernel(*refs):
        x_ref = refs[0]
        out_ref = refs[-1]
        h = x_ref[...]                                   # f32 activations
        pos = 1
        for _ in range(num_layers - 1):
            w_ref, b_ref, g_ref, beta_ref = refs[pos:pos + 4]
            pos += 4
            # bf16 operands -> MXU bf16 rate; f32 accumulation + f32 bias add.
            z = jnp.dot(h.astype(jnp.bfloat16), w_ref[...],
                        preferred_element_type=jnp.float32) + b_ref[...]
            # BatchNorm1d, training mode: biased batch statistics, single pass.
            mean = jnp.mean(z, axis=0, keepdims=True)
            mean_sq = jnp.mean(z * z, axis=0, keepdims=True)
            var = jnp.maximum(mean_sq - mean * mean, 0.0)
            # Fold the BN affine into one scale/shift on the (1, H) row.
            scale = g_ref[...] * lax.rsqrt(var + BN_EPS)
            shift = beta_ref[...] - mean * scale
            h = jnp.maximum(z * scale + shift, 0.0)      # BN + ReLU
        w_ref, b_ref = refs[pos], refs[pos + 1]
        out_ref[...] = (jnp.dot(h.astype(jnp.bfloat16), w_ref[...],
                                preferred_element_type=jnp.float32) + b_ref[...])

    return kernel


# ----------------------------------------------------------------------------
# Plain Linear kernel (num_layers == 1): batch-tiled, weights VMEM-resident.
# ----------------------------------------------------------------------------
def _linear_kernel(x_ref, w_ref, b_ref, o_ref):
    o_ref[...] = (jnp.dot(x_ref[...].astype(jnp.bfloat16), w_ref[...],
                          preferred_element_type=jnp.float32) + b_ref[...])


def _linear_forward(x, w_bf16, b):
    n, d_in = x.shape
    d_out = w_bf16.shape[1]
    # Batch tile: lane/sublane dense; fall back to the full batch if it does not tile.
    tm = 128 if (n % 128 == 0 and n > 128) else n
    grid_m = n // tm

    flops = 2 * n * d_in * d_out
    in_bytes = (x.size * x.dtype.itemsize + w_bf16.size * w_bf16.dtype.itemsize
                + b.size * b.dtype.itemsize)
    out_bytes = n * d_out * 4
    # x/out tiles + resident weight/bias, x2 for default double-buffering, + headroom.
    resident = (tm * d_in * 4 + w_bf16.size * w_bf16.dtype.itemsize
                + b.size * b.dtype.itemsize + tm * d_out * 4)
    vmem_limit = int(min(max(2 * resident + (4 << 20), 16 << 20), 64 << 20))

    return pl.pallas_call(
        _linear_kernel,
        out_shape=jax.ShapeDtypeStruct((n, d_out), jnp.float32),
        grid=(grid_m,),
        in_specs=[pl.BlockSpec((tm, d_in), lambda i: (i, 0)),
                  pl.BlockSpec(w_bf16.shape, lambda i: (0, 0)),   # weight stays resident
                  pl.BlockSpec(b.shape, lambda i: (0, 0))],
        out_specs=pl.BlockSpec((tm, d_out), lambda i: (i, 0)),
        compiler_params=pltpu.CompilerParams(
            dimension_semantics=("parallel",),          # shards across v7x's 2 TCs
            vmem_limit_bytes=vmem_limit),
        cost_estimate=pl.CostEstimate(flops=int(flops), transcendentals=0,
                                      bytes_accessed=int(in_bytes + out_bytes)),
    )(x, w_bf16, b)


# ----------------------------------------------------------------------------
# Public wrapper
# ----------------------------------------------------------------------------
def mlp_forward(x, weights, biases, bn_gammas, bn_betas):
    """Fused Pallas forward for the MLP module.

    weights[i]: (d_in_i, d_out_i) pre-transposed (y = x @ W + b), f32.
    biases[i]:  (1, d_out_i), f32.
    bn_gammas / bn_betas: (1, hidden_dim) for the first num_layers-1 layers, f32.
    """
    num_layers = len(weights)
    n = x.shape[0]
    d_out = weights[-1].shape[1]

    # Matmul operands in bf16 (bf16 MXU rate, half the weight traffic/residency);
    # accumulation and all elementwise math stay f32.
    w_bf16 = [w.astype(jnp.bfloat16) for w in weights]

    if num_layers == 1:
        return _linear_forward(x, w_bf16[0], biases[0])

    inputs = [x]
    in_specs = [_full_spec(x.shape)]
    flops = 0
    for i in range(num_layers - 1):
        w, b, g, be = w_bf16[i], biases[i], bn_gammas[i], bn_betas[i]
        inputs += [w, b, g, be]
        in_specs += [_full_spec(w.shape), _full_spec(b.shape),
                     _full_spec(g.shape), _full_spec(be.shape)]
        flops += 2 * n * w.shape[0] * w.shape[1]
    w, b = w_bf16[-1], biases[-1]
    inputs += [w, b]
    in_specs += [_full_spec(w.shape), _full_spec(b.shape)]
    flops += 2 * n * w.shape[0] * w.shape[1]

    in_bytes = sum(a.size * a.dtype.itemsize for a in inputs)
    out_bytes = n * d_out * 4
    max_width = max(x.shape[1], d_out, *(wt.shape[1] for wt in weights))
    bn_cols = sum(weights[i].shape[1] for i in range(num_layers - 1))

    # Resident-footprint VMEM budget: every full-array block is double-buffered by the
    # default pipeline (grid=(1,)), plus a few f32 (N, max_width) temporaries (z, h, ...)
    # live at once.  Capped at v7x's 64 MiB physical VMEM.
    act_bytes = 4 * n * max_width * 4
    vmem_limit = int(min(max(2 * (in_bytes + out_bytes) + act_bytes + (4 << 20),
                             16 << 20), 64 << 20))

    return pl.pallas_call(
        _make_fused_mlp_kernel(num_layers),
        out_shape=jax.ShapeDtypeStruct((n, d_out), jnp.float32),
        grid=(1,),
        in_specs=in_specs,
        out_specs=_full_spec((n, d_out)),
        compiler_params=pltpu.CompilerParams(
            dimension_semantics=("arbitrary",),
            vmem_limit_bytes=vmem_limit),
        cost_estimate=pl.CostEstimate(flops=int(flops),
                                      transcendentals=int(bn_cols),   # rsqrt rows
                                      bytes_accessed=int(in_bytes + out_bytes)),
    )(*inputs)


# ----------------------------------------------------------------------------
# Pure-JAX f32 reference (for correctness check only)
# ----------------------------------------------------------------------------
def mlp_reference(x, weights, biases, bn_gammas, bn_betas):
    num_layers = len(weights)
    h = x
    for i in range(num_layers - 1):
        z = h @ weights[i] + biases[i]
        mean = jnp.mean(z, axis=0, keepdims=True)
        var = jnp.mean((z - mean) ** 2, axis=0, keepdims=True)
        h = jnp.maximum((z - mean) / jnp.sqrt(var + BN_EPS) * bn_gammas[i]
                        + bn_betas[i], 0.0)
    return h @ weights[-1] + biases[-1]


# ----------------------------------------------------------------------------
# Deterministic parameter init (PyTorch nn.Linear / BatchNorm1d defaults)
# ----------------------------------------------------------------------------
def init_mlp_params(key, num_layers, input_dim, hidden_dim, output_dim):
    if num_layers == 1:
        dims = [(input_dim, output_dim)]
    else:
        dims = ([(input_dim, hidden_dim)]
                + [(hidden_dim, hidden_dim)] * (num_layers - 2)
                + [(hidden_dim, output_dim)])
    weights, biases = [], []
    keys = jax.random.split(key, num_layers)
    for (din, dout), k in zip(dims, keys):
        kw, kb = jax.random.split(k)
        bound = 1.0 / (din ** 0.5)
        weights.append(jax.random.uniform(kw, (din, dout), jnp.float32, -bound, bound))
        biases.append(jax.random.uniform(kb, (1, dout), jnp.float32, -bound, bound))
    bn_gammas = [jnp.ones((1, d2), jnp.float32) for (_, d2) in dims[:-1]]
    bn_betas = [jnp.zeros((1, d2), jnp.float32) for (_, d2) in dims[:-1]]
    return weights, biases, bn_gammas, bn_betas


def _check(name, out, ref):
    out = jax.device_get(out)
    ref = jax.device_get(ref)
    err = float(jnp.max(jnp.abs(out - ref)))
    scale = float(jnp.max(jnp.abs(ref))) + 1e-6
    if not err <= 5e-2 * scale + 5e-2:
        raise AssertionError(f"{name}: max abs err {err} (ref scale {scale})")


if __name__ == "__main__":
    key = jax.random.PRNGKey(0)
    kx, kp3, kp1 = jax.random.split(key, 3)

    # MXU/lane-dense small shapes: batch=256, 256 -> 256 -> 256 -> 128.
    # DIN = DH = 256 fills the 256x256 MXU contraction dim on v6e/v7x.
    N, DIN, DH, DOUT = 256, 256, 256, 128
    x = jax.random.normal(kx, (N, DIN), jnp.float32)

    # num_layers >= 2 path (Linear -> BN -> ReLU chain, final Linear).
    ws, bs, gs, betas = init_mlp_params(kp3, 3, DIN, DH, DOUT)
    out3 = jax.jit(mlp_forward)(x, ws, bs, gs, betas)
    jax.block_until_ready(out3)
    _check("mlp_3layer", out3, mlp_reference(x, ws, bs, gs, betas))

    # num_layers == 1 path (plain Linear, batch-tiled parallel grid).
    ws1, bs1, gs1, betas1 = init_mlp_params(kp1, 1, DIN, DH, DOUT)
    out1 = jax.jit(mlp_forward)(x, ws1, bs1, gs1, betas1)
    jax.block_until_ready(out1)
    _check("mlp_1layer", out1, mlp_reference(x, ws1, bs1, gs1, betas1))

    print("KERNEL_OK")
</pallas_src>

<mosaic_0001>
module attributes {stable_mosaic.version = 11 : i64} {
  func.func @kernel(%arg0: i32, %arg1: memref<256x256xf32, #tpu.memory_space<vmem>>, %arg2: memref<256x256xbf16, #tpu.memory_space<vmem>>, %arg3: memref<1x256xf32, #tpu.memory_space<vmem>>, %arg4: memref<1x256xf32, #tpu.memory_space<vmem>>, %arg5: memref<1x256xf32, #tpu.memory_space<vmem>>, %arg6: memref<256x256xbf16, #tpu.memory_space<vmem>>, %arg7: memref<1x256xf32, #tpu.memory_space<vmem>>, %arg8: memref<1x256xf32, #tpu.memory_space<vmem>>, %arg9: memref<1x256xf32, #tpu.memory_space<vmem>>, %arg10: memref<256x128xbf16, #tpu.memory_space<vmem>>, %arg11: memref<1x128xf32, #tpu.memory_space<vmem>>, %arg12: memref<256x128xf32, #tpu.memory_space<vmem>>) attributes {dimension_semantics = [#tpu.dimension_semantics<arbitrary>], iteration_bounds = array<i64: 1>, scalar_prefetch = 0 : i64, scratch_operands = 0 : i64, tpu.core_type = #tpu.core_type<tc>, window_params = [{pipeline_mode = #tpu.pipeline_mode<synchronous>, transform_indices = @transform_0, window_bounds = array<i64: 256, 256>}, {pipeline_mode = #tpu.pipeline_mode<synchronous>, transform_indices = @transform_1, window_bounds = array<i64: 256, 256>}, {pipeline_mode = #tpu.pipeline_mode<synchronous>, transform_indices = @transform_2, window_bounds = array<i64: 1, 256>}, {pipeline_mode = #tpu.pipeline_mode<synchronous>, transform_indices = @transform_3, window_bounds = array<i64: 1, 256>}, {pipeline_mode = #tpu.pipeline_mode<synchronous>, transform_indices = @transform_4, window_bounds = array<i64: 1, 256>}, {pipeline_mode = #tpu.pipeline_mode<synchronous>, transform_indices = @transform_5, window_bounds = array<i64: 256, 256>}, {pipeline_mode = #tpu.pipeline_mode<synchronous>, transform_indices = @transform_6, window_bounds = array<i64: 1, 256>}, {pipeline_mode = #tpu.pipeline_mode<synchronous>, transform_indices = @transform_7, window_bounds = array<i64: 1, 256>}, {pipeline_mode = #tpu.pipeline_mode<synchronous>, transform_indices = @transform_8, window_bounds = array<i64: 1, 256>}, {pipeline_mode = #tpu.pipeline_mode<synchronous>, transform_indices = @transform_9, window_bounds = array<i64: 256, 128>}, {pipeline_mode = #tpu.pipeline_mode<synchronous>, transform_indices = @transform_10, window_bounds = array<i64: 1, 128>}, {pipeline_mode = #tpu.pipeline_mode<synchronous>, transform_indices = @transform_11, window_bounds = array<i64: 256, 128>}]} {
    %c0 = arith.constant 0 : index
    %c0_0 = arith.constant 0 : index
    %0 = vector.load %arg1[%c0, %c0_0] : memref<256x256xf32, #tpu.memory_space<vmem>>, vector<256x256xf32>
    %1 = arith.truncf %0 : vector<256x256xf32> to vector<256x256xbf16>
    %c0_1 = arith.constant 0 : index
    %c0_2 = arith.constant 0 : index
    %2 = vector.load %arg2[%c0_1, %c0_2] : memref<256x256xbf16, #tpu.memory_space<vmem>>, vector<256x256xbf16>
    %cst = arith.constant dense<0.000000e+00> : vector<256x256xf32>
    %3 = tpu.matmul %1, %2, %cst {dimension_numbers = #tpu.dot_dimension_numbers<[1], [0], [0], [1], [0, 0, 1, 1], [], []>} : vector<256x256xbf16>, vector<256x256xbf16>, vector<256x256xf32> -> vector<256x256xf32>
    %c0_3 = arith.constant 0 : index
    %c0_4 = arith.constant 0 : index
    %4 = vector.load %arg3[%c0_3, %c0_4] : memref<1x256xf32, #tpu.memory_space<vmem>>, vector<1x256xf32>
    %5 = vector.broadcast %4 : vector<1x256xf32> to vector<256x256xf32>
    %6 = arith.addf %3, %5 : vector<256x256xf32>
    %cst_5 = arith.constant dense<0.000000e+00> : vector<256xf32>
    %7 = vector.multi_reduction <add>, %6, %cst_5 [0] : vector<256x256xf32> to vector<256xf32>
    %8 = vector.shape_cast %7 : vector<256xf32> to vector<1x256xf32>
    %cst_6 = arith.constant 2.560000e+02 : f32
    %9 = vector.broadcast %cst_6 : f32 to vector<1x256xf32>
    %10 = arith.divf %8, %9 : vector<1x256xf32>
    %11 = arith.mulf %6, %6 : vector<256x256xf32>
    %cst_7 = arith.constant dense<0.000000e+00> : vector<256xf32>
    %12 = vector.multi_reduction <add>, %11, %cst_7 [0] : vector<256x256xf32> to vector<256xf32>
    %13 = vector.shape_cast %12 : vector<256xf32> to vector<1x256xf32>
    %cst_8 = arith.constant 2.560000e+02 : f32
    %14 = vector.broadcast %cst_8 : f32 to vector<1x256xf32>
    %15 = arith.divf %13, %14 : vector<1x256xf32>
    %16 = arith.mulf %10, %10 : vector<1x256xf32>
    %17 = arith.subf %15, %16 : vector<1x256xf32>
    %cst_9 = arith.constant 0.000000e+00 : f32
    %18 = vector.broadcast %cst_9 : f32 to vector<1x256xf32>
    %19 = arith.maximumf %17, %18 : vector<1x256xf32>
    %c0_10 = arith.constant 0 : index
    %c0_11 = arith.constant 0 : index
    %20 = vector.load %arg4[%c0_10, %c0_11] : memref<1x256xf32, #tpu.memory_space<vmem>>, vector<1x256xf32>
    %cst_12 = arith.constant 9.99999974E-6 : f32
    %21 = vector.broadcast %cst_12 : f32 to vector<1x256xf32>
    %22 = arith.addf %19, %21 : vector<1x256xf32>
    %23 = math.rsqrt %22 : vector<1x256xf32>
    %24 = arith.mulf %20, %23 : vector<1x256xf32>
    %c0_13 = arith.constant 0 : index
    %c0_14 = arith.constant 0 : index
    %25 = vector.load %arg5[%c0_13, %c0_14] : memref<1x256xf32, #tpu.memory_space<vmem>>, vector<1x256xf32>
    %26 = arith.mulf %10, %24 : vector<1x256xf32>
    %27 = arith.subf %25, %26 : vector<1x256xf32>
    %28 = vector.broadcast %24 : vector<1x256xf32> to vector<256x256xf32>
    %29 = arith.mulf %6, %28 : vector<256x256xf32>
    %30 = vector.broadcast %27 : vector<1x256xf32> to vector<256x256xf32>
    %31 = arith.addf %29, %30 : vector<256x256xf32>
    %cst_15 = arith.constant 0.000000e+00 : f32
    %32 = vector.broadcast %cst_15 : f32 to vector<256x256xf32>
    %33 = arith.maximumf %31, %32 : vector<256x256xf32>
    %34 = arith.truncf %33 : vector<256x256xf32> to vector<256x256xbf16>
    %c0_16 = arith.constant 0 : index
    %c0_17 = arith.constant 0 : index
    %35 = vector.load %arg6[%c0_16, %c0_17] : memref<256x256xbf16, #tpu.memory_space<vmem>>, vector<256x256xbf16>
    %cst_18 = arith.constant dense<0.000000e+00> : vector<256x256xf32>
    %36 = tpu.matmul %34, %35, %cst_18 {dimension_numbers = #tpu.dot_dimension_numbers<[1], [0], [0], [1], [0, 0, 1, 1], [], []>} : vector<256x256xbf16>, vector<256x256xbf16>, vector<256x256xf32> -> vector<256x256xf32>
    %c0_19 = arith.constant 0 : index
    %c0_20 = arith.constant 0 : index
    %37 = vector.load %arg7[%c0_19, %c0_20] : memref<1x256xf32, #tpu.memory_space<vmem>>, vector<1x256xf32>
    %38 = vector.broadcast %37 : vector<1x256xf32> to vector<256x256xf32>
    %39 = arith.addf %36, %38 : vector<256x256xf32>
    %cst_21 = arith.constant dense<0.000000e+00> : vector<256xf32>
    %40 = vector.multi_reduction <add>, %39, %cst_21 [0] : vector<256x256xf32> to vector<256xf32>
    %41 = vector.shape_cast %40 : vector<256xf32> to vector<1x256xf32>
    %cst_22 = arith.constant 2.560000e+02 : f32
    %42 = vector.broadcast %cst_22 : f32 to vector<1x256xf32>
    %43 = arith.divf %41, %42 : vector<1x256xf32>
    %44 = arith.mulf %39, %39 : vector<256x256xf32>
    %cst_23 = arith.constant dense<0.000000e+00> : vector<256xf32>
    %45 = vector.multi_reduction <add>, %44, %cst_23 [0] : vector<256x256xf32> to vector<256xf32>
    %46 = vector.shape_cast %45 : vector<256xf32> to vector<1x256xf32>
    %cst_24 = arith.constant 2.560000e+02 : f32
    %47 = vector.broadcast %cst_24 : f32 to vector<1x256xf32>
    %48 = arith.divf %46, %47 : vector<1x256xf32>
    %49 = arith.mulf %43, %43 : vector<1x256xf32>
    %50 = arith.subf %48, %49 : vector<1x256xf32>
    %cst_25 = arith.constant 0.000000e+00 : f32
    %51 = vector.broadcast %cst_25 : f32 to vector<1x256xf32>
    %52 = arith.maximumf %50, %51 : vector<1x256xf32>
    %c0_26 = arith.constant 0 : index
    %c0_27 = arith.constant 0 : index
    %53 = vector.load %arg8[%c0_26, %c0_27] : memref<1x256xf32, #tpu.memory_space<vmem>>, vector<1x256xf32>
    %cst_28 = arith.constant 9.99999974E-6 : f32
    %54 = vector.broadcast %cst_28 : f32 to vector<1x256xf32>
    %55 = arith.addf %52, %54 : vector<1x256xf32>
    %56 = math.rsqrt %55 : vector<1x256xf32>
    %57 = arith.mulf %53, %56 : vector<1x256xf32>
    %c0_29 = arith.constant 0 : index
    %c0_30 = arith.constant 0 : index
    %58 = vector.load %arg9[%c0_29, %c0_30] : memref<1x256xf32, #tpu.memory_space<vmem>>, vector<1x256xf32>
    %59 = arith.mulf %43, %57 : vector<1x256xf32>
    %60 = arith.subf %58, %59 : vector<1x256xf32>
    %61 = vector.broadcast %57 : vector<1x256xf32> to vector<256x256xf32>
    %62 = arith.mulf %39, %61 : vector<256x256xf32>
    %63 = vector.broadcast %60 : vector<1x256xf32> to vector<256x256xf32>
    %64 = arith.addf %62, %63 : vector<256x256xf32>
    %cst_31 = arith.constant 0.000000e+00 : f32
    %65 = vector.broadcast %cst_31 : f32 to vector<256x256xf32>
    %66 = arith.maximumf %64, %65 : vector<256x256xf32>
    %67 = arith.truncf %66 : vector<256x256xf32> to vector<256x256xbf16>
    %c0_32 = arith.constant 0 : index
    %c0_33 = arith.constant 0 : index
    %68 = vector.load %arg10[%c0_32, %c0_33] : memref<256x128xbf16, #tpu.memory_space<vmem>>, vector<256x128xbf16>
    %cst_34 = arith.constant dense<0.000000e+00> : vector<256x128xf32>
    %69 = tpu.matmul %67, %68, %cst_34 {dimension_numbers = #tpu.dot_dimension_numbers<[1], [0], [0], [1], [0, 0, 1, 1], [], []>} : vector<256x256xbf16>, vector<256x128xbf16>, vector<256x128xf32> -> vector<256x128xf32>
    %c0_35 = arith.constant 0 : index
    %c0_36 = arith.constant 0 : index
    %70 = vector.load %arg11[%c0_35, %c0_36] : memref<1x128xf32, #tpu.memory_space<vmem>>, vector<1x128xf32>
    %71 = vector.broadcast %70 : vector<1x128xf32> to vector<256x128xf32>
    %72 = arith.addf %69, %71 : vector<256x128xf32>
    %c0_37 = arith.constant 0 : index
    %c0_38 = arith.constant 0 : index
    %73 = vector.load %arg12[%c0_37, %c0_38] : memref<256x128xf32, #tpu.memory_space<vmem>>, vector<256x128xf32>
    tpu.vector_store %arg12[%c0_37, %c0_38], %72 {strides = array<i32>} : memref<256x128xf32, #tpu.memory_space<vmem>>, vector<256x128xf32>,
    return
  }
  func.func @transform_0(%arg0: i32) -> (i32, i32) {
    %c0_i32 = arith.constant 0 : i32
    %c0_i32_0 = arith.constant 0 : i32
    %c0_i32_1 = arith.constant 0 : i32
    return %c0_i32, %c0_i32_0 : i32, i32
  }
  func.func @transform_1(%arg0: i32) -> (i32, i32) {
    %c0_i32 = arith.constant 0 : i32
    %c0_i32_0 = arith.constant 0 : i32
    %c0_i32_1 = arith.constant 0 : i32
    return %c0_i32, %c0_i32_0 : i32, i32
  }
  func.func @transform_2(%arg0: i32) -> (i32, i32) {
    %c0_i32 = arith.constant 0 : i32
    %c0_i32_0 = arith.constant 0 : i32
    %c0_i32_1 = arith.constant 0 : i32
    return %c0_i32, %c0_i32_0 : i32, i32
  }
  func.func @transform_3(%arg0: i32) -> (i32, i32) {
    %c0_i32 = arith.constant 0 : i32
    %c0_i32_0 = arith.constant 0 : i32
    %c0_i32_1 = arith.constant 0 : i32
    return %c0_i32, %c0_i32_0 : i32, i32
  }
  func.func @transform_4(%arg0: i32) -> (i32, i32) {
    %c0_i32 = arith.constant 0 : i32
    %c0_i32_0 = arith.constant 0 : i32
    %c0_i32_1 = arith.constant 0 : i32
    return %c0_i32, %c0_i32_0 : i32, i32
  }
  func.func @transform_5(%arg0: i32) -> (i32, i32) {
    %c0_i32 = arith.constant 0 : i32
    %c0_i32_0 = arith.constant 0 : i32
    %c0_i32_1 = arith.constant 0 : i32
    return %c0_i32, %c0_i32_0 : i32, i32
  }
  func.func @transform_6(%arg0: i32) -> (i32, i32) {
    %c0_i32 = arith.constant 0 : i32
    %c0_i32_0 = arith.constant 0 : i32
    %c0_i32_1 = arith.constant 0 : i32
    return %c0_i32, %c0_i32_0 : i32, i32
  }
  func.func @transform_7(%arg0: i32) -> (i32, i32) {
    %c0_i32 = arith.constant 0 : i32
    %c0_i32_0 = arith.constant 0 : i32
    %c0_i32_1 = arith.constant 0 : i32
    return %c0_i32, %c0_i32_0 : i32, i32
  }
  func.func @transform_8(%arg0: i32) -> (i32, i32) {
    %c0_i32 = arith.constant 0 : i32
    %c0_i32_0 = arith.constant 0 : i32
    %c0_i32_1 = arith.constant 0 : i32
    return %c0_i32, %c0_i32_0 : i32, i32
  }
  func.func @transform_9(%arg0: i32) -> (i32, i32) {
    %c0_i32 = arith.constant 0 : i32
    %c0_i32_0 = arith.constant 0 : i32
    %c0_i32_1 = arith.constant 0 : i32
    return %c0_i32, %c0_i32_0 : i32, i32
  }
  func.func @transform_10(%arg0: i32) -> (i32, i32) {
    %c0_i32 = arith.constant 0 : i32
    %c0_i32_0 = arith.constant 0 : i32
    %c0_i32_1 = arith.constant 0 : i32
    return %c0_i32, %c0_i32_0 : i32, i32
  }
  func.func @transform_11(%arg0: i32) -> (i32, i32) {
    %c0_i32 = arith.constant 0 : i32
    %c0_i32_0 = arith.constant 0 : i32
    %c0_i32_1 = arith.constant 0 : i32
    return %c0_i32, %c0_i32_0 : i32, i32
  }
}

</mosaic_0001>

<llo_original>
// kernel: mlp_forward.1
$region0: #{mlp_forward.1}
  #allocation0 [shape = 'u32[]', space=smem, size = 0x4, offset = 0x4, fixed_abs, tag = 'smem constant byte address 0x4 - core index']
  #allocation1 [shape = 'u32[144,128]{1,0:T(1,128)}', space=vmem, size = 0x12000, scoped, tag = 'internal scratch']
  %s0 = inlined_call_operand.vmem [shape: f32[256,256], index: 0, kind: input, shape index: {}]
  %s1 = inlined_call_operand.vmem [shape: bf16[256,256], index: 1, kind: input, shape index: {}]
  %s2 = inlined_call_operand.vmem [shape: f32[1,256], index: 2, kind: input, shape index: {}]
  %s3 = inlined_call_operand.vmem [shape: f32[1,256], index: 3, kind: input, shape index: {}]
  %s4 = inlined_call_operand.vmem [shape: f32[1,256], index: 4, kind: input, shape index: {}]
  %s5 = inlined_call_operand.vmem [shape: bf16[256,256], index: 5, kind: input, shape index: {}]
  %s6 = inlined_call_operand.vmem [shape: f32[1,256], index: 6, kind: input, shape index: {}]
  %s7 = inlined_call_operand.vmem [shape: f32[1,256], index: 7, kind: input, shape index: {}]
  %s8 = inlined_call_operand.vmem [shape: f32[1,256], index: 8, kind: input, shape index: {}]
  %s9 = inlined_call_operand.vmem [shape: bf16[256,128], index: 9, kind: input, shape index: {}]
  %s10 = inlined_call_operand.vmem [shape: f32[1,128], index: 10, kind: input, shape index: {}]
  %s11 = inlined_call_operand.hbm [shape: f32[256,128], index: 11, kind: output, shape index: {}]
  %s12 = sld [smem:[#allocation0]]
  $region54: #{mlp_forward.1} parent=0
    _
  %s14 = ssub.s32 1, %s12
  %s15 = scalar_select 0, %s14, %s12
  $region1: #{mlp_forward.1} parent=0
    #allocation2 [shape = 'u8[131072]{0}', space=vmem, size = 0x20000, scoped, tag = 'output window, operand 0, single buffered']
    #allocation3 [shape = 's32[1]{0}', space=sflag, size = 0x4, scoped, tag = 'scoped memory for mlp_forward.1']
    %16 = vsyncpa [#allocation3], 0
    // Predicated region
    $region2: #{mlp_forward.1} parent=1 // pred_check
      _
    $region3: #{mlp_forward.1} parent=1 // pred_check_branch
      %18 = sbr.rel (0) target = $region5
    $region4: #{mlp_forward.1} parent=1 // pred_region
      _
    $region5: #{mlp_forward.1} parent=1 // pred_fallthru
      _
    // Predicated region
    $region6: #{mlp_forward.1} parent=1 // pred_check
      _
    $region7: #{mlp_forward.1} parent=1 // pred_check_branch
      %20 = sbr.rel (0) target = $region9
    $region8: #{mlp_forward.1} parent=1 // pred_region
      _
    $region9: #{mlp_forward.1} parent=1 // pred_fallthru
      _
    // Predicated region
    $region10: #{mlp_forward.1} parent=1 // pred_check
      _
    $region11: #{mlp_forward.1} parent=1 // pred_check_branch
      %22 = sbr.rel (0) target = $region13
    $region12: #{mlp_forward.1} parent=1 // pred_region
      _
    $region13: #{mlp_forward.1} parent=1 // pred_fallthru
      _
    // Predicated region
    $region14: #{mlp_forward.1} parent=1 // pred_check
      _
    $region15: #{mlp_forward.1} parent=1 // pred_check_branch
      %24 = sbr.rel (0) target = $region17
    $region16: #{mlp_forward.1} parent=1 // pred_region
      _
    $region17: #{mlp_forward.1} parent=1 // pred_fallthru
      _
    // Predicated region
    $region18: #{mlp_forward.1} parent=1 // pred_check
      _
    $region19: #{mlp_forward.1} parent=1 // pred_check_branch
      %26 = sbr.rel (0) target = $region21
    $region20: #{mlp_forward.1} parent=1 // pred_region
      _
    $region21: #{mlp_forward.1} parent=1 // pred_fallthru
      _
    // Predicated region
    $region22: #{mlp_forward.1} parent=1 // pred_check
      _
    $region23: #{mlp_forward.1} parent=1 // pred_check_branch
      %28 = sbr.rel (0) target = $region25
    $region24: #{mlp_forward.1} parent=1 // pred_region
      _
    $region25: #{mlp_forward.1} parent=1 // pred_fallthru
      _
    // Predicated region
    $region26: #{mlp_forward.1} parent=1 // pred_check
      _
    $region27: #{mlp_forward.1} parent=1 // pred_check_branch
      %30 = sbr.rel (0) target = $region29
    $region28: #{mlp_forward.1} parent=1 // pred_region
      _
    $region29: #{mlp_forward.1} parent=1 // pred_fallthru
      _
    // Predicated region
    $region30: #{mlp_forward.1} parent=1 // pred_check
      _
    $region31: #{mlp_forward.1} parent=1 // pred_check_branch
      %32 = sbr.rel (0) target = $region33
    $region32: #{mlp_forward.1} parent=1 // pred_region
      _
    $region33: #{mlp_forward.1} parent=1 // pred_fallthru
      _
    // Predicated region
    $region34: #{mlp_forward.1} parent=1 // pred_check
      _
    $region35: #{mlp_forward.1} parent=1 // pred_check_branch
      %34 = sbr.rel (0) target = $region37
    $region36: #{mlp_forward.1} parent=1 // pred_region
      _
    $region37: #{mlp_forward.1} parent=1 // pred_fallthru
      _
    // Predicated region
    $region38: #{mlp_forward.1} parent=1 // pred_check
      _
    $region39: #{mlp_forward.1} parent=1 // pred_check_branch
      %36 = sbr.rel (0) target = $region41
    $region40: #{mlp_forward.1} parent=1 // pred_region
      _
    $region41: #{mlp_forward.1} parent=1 // pred_fallthru
      _
    // Predicated region
    $region42: #{mlp_forward.1} parent=1 // pred_check
      _
    $region43: #{mlp_forward.1} parent=1 // pred_check_branch
      %38 = sbr.rel (0) target = $region45
    $region44: #{mlp_forward.1} parent=1 // pred_region
      _
    $region45: #{mlp_forward.1} parent=1 // pred_fallthru
      _
    %v40 = vld [vmem:[%s0] sm:$0xff]
    %v41 = vld [vmem:[%s0 + $0x8] sm:$0xff]
    %v42 = vld [vmem:[%s0 + $0x10] sm:$0xff]
    %v43 = vld [vmem:[%s0 + $0x18] sm:$0xff]
    %v44 = vld [vmem:[%s0 + $0x20] sm:$0xff]
    %v45 = vld [vmem:[%s0 + $0x28] sm:$0xff]
    %v46 = vld [vmem:[%s0 + $0x30] sm:$0xff]
    %v47 = vld [vmem:[%s0 + $0x38] sm:$0xff]
    %v48 = vld [vmem:[%s0 + $0x40] sm:$0xff]
    %v49 = vld [vmem:[%s0 + $0x48] sm:$0xff]
    %v50 = vld [vmem:[%s0 + $0x50] sm:$0xff]
    %v51 = vld [vmem:[%s0 + $0x58] sm:$0xff]
    %v52 = vld [vmem:[%s0 + $0x60] sm:$0xff]
    %v53 = vld [vmem:[%s0 + $0x68] sm:$0xff]
    %v54 = vld [vmem:[%s0 + $0x70] sm:$0xff]
    %v55 = vld [vmem:[%s0 + $0x78] sm:$0xff]
    %v56 = vld [vmem:[%s0 + $0x80] sm:$0xff]
    %v57 = vld [vmem:[%s0 + $0x88] sm:$0xff]
    %v58 = vld [vmem:[%s0 + $0x90] sm:$0xff]
    %v59 = vld [vmem:[%s0 + $0x98] sm:$0xff]
    %v60 = vld [vmem:[%s0 + $0xa0] sm:$0xff]
    %v61 = vld [vmem:[%s0 + $0xa8] sm:$0xff]
    %v62 = vld [vmem:[%s0 + $0xb0] sm:$0xff]
    %v63 = vld [vmem:[%s0 + $0xb8] sm:$0xff]
    %v64 = vld [vmem:[%s0 + $0xc0] sm:$0xff]
    %v65 = vld [vmem:[%s0 + $0xc8] sm:$0xff]
    %v66 = vld [vmem:[%s0 + $0xd0] sm:$0xff]
    %v67 = vld [vmem:[%s0 + $0xd8] sm:$0xff]
    %v68 = vld [vmem:[%s0 + $0xe0] sm:$0xff]
    %v69 = vld [vmem:[%s0 + $0xe8] sm:$0xff]
    %v70 = vld [vmem:[%s0 + $0xf0] sm:$0xff]
    %v71 = vld [vmem:[%s0 + $0xf8] sm:$0xff]
    %v72 = vld [vmem:[%s0 + $0x100] sm:$0xff]
    %v73 = vld [vmem:[%s0 + $0x108] sm:$0xff]
    %v74 = vld [vmem:[%s0 + $0x110] sm:$0xff]
    %v75 = vld [vmem:[%s0 + $0x118] sm:$0xff]
    %v76 = vld [vmem:[%s0 + $0x120] sm:$0xff]
    %v77 = vld [vmem:[%s0 + $0x128] sm:$0xff]
    %v78 = vld [vmem:[%s0 + $0x130] sm:$0xff]
    %v79 = vld [vmem:[%s0 + $0x138] sm:$0xff]
    %v80 = vld [vmem:[%s0 + $0x140] sm:$0xff]
    %v81 = vld [vmem:[%s0 + $0x148] sm:$0xff]
    %v82 = vld [vmem:[%s0 + $0x150] sm:$0xff]
    %v83 = vld [vmem:[%s0 + $0x158] sm:$0xff]
    %v84 = vld [vmem:[%s0 + $0x160] sm:$0xff]
    %v85 = vld [vmem:[%s0 + $0x168] sm:$0xff]
    %v86 = vld [vmem:[%s0 + $0x170] sm:$0xff]
    %v87 = vld [vmem:[%s0 + $0x178] sm:$0xff]
    %v88 = vld [vmem:[%s0 + $0x180] sm:$0xff]
    %v89 = vld [vmem:[%s0 + $0x188] sm:$0xff]
    %v90 = vld [vmem:[%s0 + $0x190] sm:$0xff]
    %v91 = vld [vmem:[%s0 + $0x198] sm:$0xff]
    %v92 = vld [vmem:[%s0 + $0x1a0] sm:$0xff]
    %v93 = vld [vmem:[%s0 + $0x1a8] sm:$0xff]
    %v94 = vld [vmem:[%s0 + $0x1b0] sm:$0xff]
    %v95 = vld [vmem:[%s0 + $0x1b8] sm:$0xff]
    %v96 = vld [vmem:[%s0 + $0x1c0] sm:$0xff]
    %v97 = vld [vmem:[%s0 + $0x1c8] sm:$0xff]
    %v98 = vld [vmem:[%s0 + $0x1d0] sm:$0xff]
    %v99 = vld [vmem:[%s0 + $0x1d8] sm:$0xff]
    %v100 = vld [vmem:[%s0 + $0x1e0] sm:$0xff]
    %v101 = vld [vmem:[%s0 + $0x1e8] sm:$0xff]
    %v102 = vld [vmem:[%s0 + $0x1f0] sm:$0xff]
    %v103 = vld [vmem:[%s0 + $0x1f8] sm:$0xff]
    %v104 = vpack.c.bf16 %v42, %v40
    %v105 = vpack.c.bf16 %v43, %v41
    %v106 = vpack.c.bf16 %v46, %v44
    %v107 = vpack.c.bf16 %v47, %v45
    %v108 = vpack.c.bf16 %v50, %v48
    %v109 = vpack.c.bf16 %v51, %v49
    %v110 = vpack.c.bf16 %v54, %v52
    %v111 = vpack.c.bf16 %v55, %v53
    %v112 = vpack.c.bf16 %v58, %v56
    %v113 = vpack.c.bf16 %v59, %v57
    %v114 = vpack.c.bf16 %v62, %v60
    %v115 = vpack.c.bf16 %v63, %v61
    %v116 = vpack.c.bf16 %v66, %v64
    %v117 = vpack.c.bf16 %v67, %v65
    %v118 = vpack.c.bf16 %v70, %v68
    %v119 = vpack.c.bf16 %v71, %v69
    %v120 = vpack.c.bf16 %v74, %v72
    %v121 = vpack.c.bf16 %v75, %v73
    %v122 = vpack.c.bf16 %v78, %v76
    %v123 = vpack.c.bf16 %v79, %v77
    %v124 = vpack.c.bf16 %v82, %v80
    %v125 = vpack.c.bf16 %v83, %v81
    %v126 = vpack.c.bf16 %v86, %v84
    %v127 = vpack.c.bf16 %v87, %v85
    %v128 = vpack.c.bf16 %v90, %v88
    %v129 = vpack.c.bf16 %v91, %v89
    %v130 = vpack.c.bf16 %v94, %v92
    %v131 = vpack.c.bf16 %v95, %v93
    %v132 = vpack.c.bf16 %v98, %v96
    %v133 = vpack.c.bf16 %v99, %v97
    %v134 = vpack.c.bf16 %v102, %v100
    %v135 = vpack.c.bf16 %v103, %v101
    %v136 = vld [vmem:[%s1] sm:$0xff]
    %v137 = vld [vmem:[%s1 + $0x8] sm:$0xff]
    %v138 = vld [vmem:[%s1 + $0x10] sm:$0xff]
    %v139 = vld [vmem:[%s1 + $0x18] sm:$0xff]
    %v140 = vld [vmem:[%s1 + $0x20] sm:$0xff]
    %v141 = vld [vmem:[%s1 + $0x28] sm:$0xff]
    %v142 = vld [vmem:[%s1 + $0x30] sm:$0xff]
    %v143 = vld [vmem:[%s1 + $0x38] sm:$0xff]
    %v144 = vld [vmem:[%s1 + $0x40] sm:$0xff]
    %v145 = vld [vmem:[%s1 + $0x48] sm:$0xff]
    %v146 = vld [vmem:[%s1 + $0x50] sm:$0xff]
    %v147 = vld [vmem:[%s1 + $0x58] sm:$0xff]
    %v148 = vld [vmem:[%s1 + $0x60] sm:$0xff]
    %v149 = vld [vmem:[%s1 + $0x68] sm:$0xff]
    %v150 = vld [vmem:[%s1 + $0x70] sm:$0xff]
    %v151 = vld [vmem:[%s1 + $0x78] sm:$0xff]
    %v152 = vld [vmem:[%s1 + $0x80] sm:$0xff]
    %v153 = vld [vmem:[%s1 + $0x88] sm:$0xff]
    %v154 = vld [vmem:[%s1 + $0x90] sm:$0xff]
    %v155 = vld [vmem:[%s1 + $0x98] sm:$0xff]
    %v156 = vld [vmem:[%s1 + $0xa0] sm:$0xff]
    %v157 = vld [vmem:[%s1 + $0xa8] sm:$0xff]
    %v158 = vld [vmem:[%s1 + $0xb0] sm:$0xff]
    %v159 = vld [vmem:[%s1 + $0xb8] sm:$0xff]
    %v160 = vld [vmem:[%s1 + $0xc0] sm:$0xff]
    %v161 = vld [vmem:[%s1 + $0xc8] sm:$0xff]
    %v162 = vld [vmem:[%s1 + $0xd0] sm:$0xff]
    %v163 = vld [vmem:[%s1 + $0xd8] sm:$0xff]
    %v164 = vld [vmem:[%s1 + $0xe0] sm:$0xff]
    %v165 = vld [vmem:[%s1 + $0xe8] sm:$0xff]
    %v166 = vld [vmem:[%s1 + $0xf0] sm:$0xff]
    %v167 = vld [vmem:[%s1 + $0xf8] sm:$0xff]
    %v168 = vld [vmem:[%s2] sm:$0x3]
    %v170 = vlaneseq
    %v171 = vshrl.u32 %v170, 7
    %v172 = vsub.s32 0, %v171
    %v173 = vrot.slane %v168, %v172
    %v174 = vlaneseq
    %v175 = vshrl.u32 %v174, 7
    %v176 = vsub.s32 1, %v175
    %v177 = vrot.slane %v168, %v176
    %v212 = vunpack.c.l.b16 %v136
    %v213 = vunpack.c.h.b16 %v136
    %v214 = vunpack.c.l.b16 %v137
    %v215 = vunpack.c.h.b16 %v137
    %v216 = vunpack.c.l.b16 %v138
    %v217 = vunpack.c.h.b16 %v138
    %v218 = vunpack.c.l.b16 %v139
    %v219 = vunpack.c.h.b16 %v139
    %v220 = vunpack.c.l.b16 %v140
    %v221 = vunpack.c.h.b16 %v140
    %v222 = vunpack.c.l.b16 %v141
    %v223 = vunpack.c.h.b16 %v141
    %v224 = vunpack.c.l.b16 %v142
    %v225 = vunpack.c.h.b16 %v142
    %v226 = vunpack.c.l.b16 %v143
    %v227 = vunpack.c.h.b16 %v143
    %v228 = vunpack.c.l.b16 %v144
    %v229 = vunpack.c.h.b16 %v144
    %v230 = vunpack.c.l.b16 %v145
    %v231 = vunpack.c.h.b16 %v145
    %v232 = vunpack.c.l.b16 %v146
    %v233 = vunpack.c.h.b16 %v146
    %v234 = vunpack.c.l.b16 %v147
    %v235 = vunpack.c.h.b16 %v147
    %v236 = vunpack.c.l.b16 %v148
    %v237 = vunpack.c.h.b16 %v148
    %v238 = vunpack.c.l.b16 %v149
    %v239 = vunpack.c.h.b16 %v149
    %v240 = vunpack.c.l.b16 %v150
    %v241 = vunpack.c.h.b16 %v150
    %v242 = vunpack.c.l.b16 %v151
    %v243 = vunpack.c.h.b16 %v151
    %v244 = vunpack.c.l.b16 %v152
    %v245 = vunpack.c.h.b16 %v152
    %v246 = vunpack.c.l.b16 %v153
    %v247 = vunpack.c.h.b16 %v153
    %v248 = vunpack.c.l.b16 %v154
    %v249 = vunpack.c.h.b16 %v154
    %v250 = vunpack.c.l.b16 %v155
    %v251 = vunpack.c.h.b16 %v155
    %v252 = vunpack.c.l.b16 %v156
    %v253 = vunpack.c.h.b16 %v156
    %v254 = vunpack.c.l.b16 %v157
    %v255 = vunpack.c.h.b16 %v157
    %v256 = vunpack.c.l.b16 %v158
    %v257 = vunpack.c.h.b16 %v158
    %v258 = vunpack.c.l.b16 %v159
    %v259 = vunpack.c.h.b16 %v159
    %v260 = vunpack.c.l.b16 %v160
    %v261 = vunpack.c.h.b16 %v160
    %v262 = vunpack.c.l.b16 %v161
    %v263 = vunpack.c.h.b16 %v161
    %v264 = vunpack.c.l.b16 %v162
    %v265 = vunpack.c.h.b16 %v162
    %v266 = vunpack.c.l.b16 %v163
    %v267 = vunpack.c.h.b16 %v163
    %v268 = vunpack.c.l.b16 %v164
    %v269 = vunpack.c.h.b16 %v164
    %v270 = vunpack.c.l.b16 %v165
    %v271 = vunpack.c.h.b16 %v165
    %v272 = vunpack.c.l.b16 %v166
    %v273 = vunpack.c.h.b16 %v166
    %v274 = vunpack.c.l.b16 %v167
    %v275 = vunpack.c.h.b16 %v167
    %v276 = vpack.c.b16 %v214, %v212
    %v277 = vpack.c.b16 %v215, %v213
    %v278 = vpack.c.b16 %v218, %v216
    %v279 = vpack.c.b16 %v219, %v217
    %v280 = vpack.c.b16 %v222, %v220
    %v281 = vpack.c.b16 %v223, %v221
    %v282 = vpack.c.b16 %v226, %v224
    %v283 = vpack.c.b16 %v227, %v225
    %v284 = vpack.c.b16 %v230, %v228
    %v285 = vpack.c.b16 %v231, %v229
    %v286 = vpack.c.b16 %v234, %v232
    %v287 = vpack.c.b16 %v235, %v233
    %v288 = vpack.c.b16 %v238, %v236
    %v289 = vpack.c.b16 %v239, %v237
    %v290 = vpack.c.b16 %v242, %v240
    %v291 = vpack.c.b16 %v243, %v241
    %v292 = vpack.c.b16 %v246, %v244
    %v293 = vpack.c.b16 %v247, %v245
    %v294 = vpack.c.b16 %v250, %v248
    %v295 = vpack.c.b16 %v251, %v249
    %v296 = vpack.c.b16 %v254, %v252
    %v297 = vpack.c.b16 %v255, %v253
    %v298 = vpack.c.b16 %v258, %v256
    %v299 = vpack.c.b16 %v259, %v257
    %v300 = vpack.c.b16 %v262, %v260
    %v301 = vpack.c.b16 %v263, %v261
    %v302 = vpack.c.b16 %v266, %v264
    %v303 = vpack.c.b16 %v267, %v265
    %v304 = vpack.c.b16 %v270, %v268
    %v305 = vpack.c.b16 %v271, %v269
    %v306 = vpack.c.b16 %v274, %v272
    %v307 = vpack.c.b16 %v275, %v273
    %340 = vmatprep.subr.bf16.mxu0 %v291
    %341 = vmatpush1.bf16.msra.mxu0 %v290
    %342 = vmatprep.subr.bf16.mxu0 %v289
    %343 = vmatpush1.bf16.msra.mxu0 %v288
    %344 = vmatprep.subr.bf16.mxu0 %v287
    %345 = vmatpush1.bf16.msra.mxu0 %v286
    %346 = vmatprep.subr.bf16.mxu0 %v285
    %347 = vmatpush1.bf16.msra.mxu0 %v284
    %348 = vmatprep.subr.bf16.mxu0 %v283
    %349 = vmatpush1.bf16.msra.mxu0 %v282
    %350 = vmatprep.subr.bf16.mxu0 %v281
    %351 = vmatpush1.bf16.msra.mxu0 %v280
    %352 = vmatprep.subr.bf16.mxu0 %v279
    %353 = vmatpush1.bf16.msra.mxu0 %v278
    %354 = vmatprep.subr.bf16.mxu0 %v277
    %355 = vmatpush1.bf16.msra.mxu0 %v276
    %356 = vmatprep.subr.bf16.mxu0 %v307
    %357 = vmatpush2.bf16.msra.mxu0 %v306
    %358 = vmatprep.subr.bf16.mxu0 %v305
    %359 = vmatpush2.bf16.msra.mxu0 %v304
    %360 = vmatprep.subr.bf16.mxu0 %v303
    %361 = vmatpush2.bf16.msra.mxu0 %v302
    %362 = vmatprep.subr.bf16.mxu0 %v301
    %363 = vmatpush2.bf16.msra.mxu0 %v300
    %364 = vmatprep.subr.bf16.mxu0 %v299
    %365 = vmatpush2.bf16.msra.mxu0 %v298
    %366 = vmatprep.subr.bf16.mxu0 %v297
    %367 = vmatpush2.bf16.msra.mxu0 %v296
    %368 = vmatprep.subr.bf16.mxu0 %v295
    %369 = vmatpush2.bf16.msra.mxu0 %v294
    %370 = vmatprep.subr.bf16.mxu0 %v293
    %371 = vmatpush2.bf16.msra.mxu0 %v292
    %372 = vmatprep.mubr.bf16.mxu0 %v105
    %373 = vmatmul.mubr.bf16.gmra.mxu0 %v104
    %v374 = vpop.f32.mrf.mxu0
    %v375 = vadd.f32 %v173, %v374
    %v376 = vpop.f32.mrf.mxu0
    %v377 = vadd.f32 %v177, %v376
    %v378 = vpop.f32.mrf.mxu0
    %v379 = vadd.f32 %v173, %v378
    %v380 = vpop.f32.mrf.mxu0
    %v381 = vadd.f32 %v177, %v380
    %382 = vmatprep.mubr.bf16.mxu0 %v107
    %383 = vmatmul.mubr.bf16.gmra.mxu0 %v106
    %v384 = vpop.f32.mrf.mxu0
    %v385 = vadd.f32 %v173, %v384
    %v386 = vpop.f32.mrf.mxu0
    %v387 = vadd.f32 %v177, %v386
    %v388 = vpop.f32.mrf.mxu0
    %v389 = vadd.f32 %v173, %v388
    %v390 = vpop.f32.mrf.mxu0
    %v391 = vadd.f32 %v177, %v390
    %392 = vmatprep.mubr.bf16.mxu0 %v109
    %393 = vmatmul.mubr.bf16.gmra.mxu0 %v108
    %v394 = vpop.f32.mrf.mxu0
    %v395 = vadd.f32 %v173, %v394
    %v396 = vpop.f32.mrf.mxu0
    %v397 = vadd.f32 %v177, %v396
    %v398 = vpop.f32.mrf.mxu0
    %v399 = vadd.f32 %v173, %v398
    %v400 = vpop.f32.mrf.mxu0
    %v401 = vadd.f32 %v177, %v400
    %402 = vmatprep.mubr.bf16.mxu0 %v111
    %403 = vmatmul.mubr.bf16.gmra.mxu0 %v110
    %v404 = vpop.f32.mrf.mxu0
    %v405 = vadd.f32 %v173, %v404
    %v406 = vpop.f32.mrf.mxu0
    %v407 = vadd.f32 %v177, %v406
    %v408 = vpop.f32.mrf.mxu0
    %v409 = vadd.f32 %v173, %v408
    %v410 = vpop.f32.mrf.mxu0
    %v411 = vadd.f32 %v177, %v410
    %412 = vmatprep.mubr.bf16.mxu0 %v113
    %413 = vmatmul.mubr.bf16.gmra.mxu0 %v112
    %v414 = vpop.f32.mrf.mxu0
    %v415 = vadd.f32 %v173, %v414
    %v416 = vpop.f32.mrf.mxu0
    %v417 = vadd.f32 %v177, %v416
    %v418 = vpop.f32.mrf.mxu0
    %v419 = vadd.f32 %v173, %v418
    %v420 = vpop.f32.mrf.mxu0
    %v421 = vadd.f32 %v177, %v420
    %422 = vmatprep.mubr.bf16.mxu0 %v115
    %423 = vmatmul.mubr.bf16.gmra.mxu0 %v114
    %v424 = vpop.f32.mrf.mxu0
    %v425 = vadd.f32 %v173, %v424
    %v426 = vpop.f32.mrf.mxu0
    %v427 = vadd.f32 %v177, %v426
    %v428 = vpop.f32.mrf.mxu0
    %v429 = vadd.f32 %v173, %v428
    %v430 = vpop.f32.mrf.mxu0
    %v431 = vadd.f32 %v177, %v430
    %432 = vmatprep.mubr.bf16.mxu0 %v117
    %433 = vmatmul.mubr.bf16.gmra.mxu0 %v116
    %v434 = vpop.f32.mrf.mxu0
    %v435 = vadd.f32 %v173, %v434
    %v436 = vpop.f32.mrf.mxu0
    %v437 = vadd.f32 %v177, %v436
    %v438 = vpop.f32.mrf.mxu0
    %v439 = vadd.f32 %v173, %v438
    %v440 = vpop.f32.mrf.mxu0
    %v441 = vadd.f32 %v177, %v440
    %442 = vmatprep.mubr.bf16.mxu0 %v119
    %443 = vmatmul.mubr.bf16.gmra.mxu0 %v118
    %v444 = vpop.f32.mrf.mxu0
    %v445 = vadd.f32 %v173, %v444
    %v446 = vpop.f32.mrf.mxu0
    %v447 = vadd.f32 %v177, %v446
    %v448 = vpop.f32.mrf.mxu0
    %v449 = vadd.f32 %v173, %v448
    %v450 = vpop.f32.mrf.mxu0
    %v451 = vadd.f32 %v177, %v450
    %452 = vmatprep.mubr.bf16.mxu0 %v121
    %453 = vmatmul.mubr.bf16.gmra.mxu0 %v120
    %v454 = vpop.f32.mrf.mxu0
    %v455 = vadd.f32 %v173, %v454
    %v456 = vpop.f32.mrf.mxu0
    %v457 = vadd.f32 %v177, %v456
    %v458 = vpop.f32.mrf.mxu0
    %v459 = vadd.f32 %v173, %v458
    %v460 = vpop.f32.mrf.mxu0
    %v461 = vadd.f32 %v177, %v460
    %462 = vmatprep.mubr.bf16.mxu0 %v123
    %463 = vmatmul.mubr.bf16.gmra.mxu0 %v122
    %v464 = vpop.f32.mrf.mxu0
    %v465 = vadd.f32 %v173, %v464
    %v466 = vpop.f32.mrf.mxu0
    %v467 = vadd.f32 %v177, %v466
    %v468 = vpop.f32.mrf.mxu0
    %v469 = vadd.f32 %v173, %v468
    %v470 = vpop.f32.mrf.mxu0
    %v471 = vadd.f32 %v177, %v470
    %472 = vmatprep.mubr.bf16.mxu0 %v125
    %473 = vmatmul.mubr.bf16.gmra.mxu0 %v124
    %v474 = vpop.f32.mrf.mxu0
    %v475 = vadd.f32 %v173, %v474
    %v476 = vpop.f32.mrf.mxu0
    %v477 = vadd.f32 %v177, %v476
    %v478 = vpop.f32.mrf.mxu0
    %v479 = vadd.f32 %v173, %v478
    %v480 = vpop.f32.mrf.mxu0
    %v481 = vadd.f32 %v177, %v480
    %482 = vmatprep.mubr.bf16.mxu0 %v127
    %483 = vmatmul.mubr.bf16.gmra.mxu0 %v126
    %v484 = vpop.f32.mrf.mxu0
    %v485 = vadd.f32 %v173, %v484
    %v486 = vpop.f32.mrf.mxu0
    %v487 = vadd.f32 %v177, %v486
    %v488 = vpop.f32.mrf.mxu0
    %v489 = vadd.f32 %v173, %v488
    %v490 = vpop.f32.mrf.mxu0
    %v491 = vadd.f32 %v177, %v490
    %492 = vmatprep.mubr.bf16.mxu0 %v129
    %493 = vmatmul.mubr.bf16.gmra.mxu0 %v128
    %v494 = vpop.f32.mrf.mxu0
    %v495 = vadd.f32 %v173, %v494
    %v496 = vpop.f32.mrf.mxu0
    %v497 = vadd.f32 %v177, %v496
    %v498 = vpop.f32.mrf.mxu0
    %v499 = vadd.f32 %v173, %v498
    %v500 = vpop.f32.mrf.mxu0
    %v501 = vadd.f32 %v177, %v500
    %502 = vmatprep.mubr.bf16.mxu0 %v131
    %503 = vmatmul.mubr.bf16.gmra.mxu0 %v130
    %v504 = vpop.f32.mrf.mxu0
    %v505 = vadd.f32 %v173, %v504
    %v506 = vpop.f32.mrf.mxu0
    %v507 = vadd.f32 %v177, %v506
    %v508 = vpop.f32.mrf.mxu0
    %v509 = vadd.f32 %v173, %v508
    %v510 = vpop.f32.mrf.mxu0
    %v511 = vadd.f32 %v177, %v510
    %512 = vmatprep.mubr.bf16.mxu0 %v133
    %513 = vmatmul.mubr.bf16.gmra.mxu0 %v132
    %v514 = vpop.f32.mrf.mxu0
    %v515 = vadd.f32 %v173, %v514
    %v516 = vpop.f32.mrf.mxu0
    %v517 = vadd.f32 %v177, %v516
    %v518 = vpop.f32.mrf.mxu0
    %v519 = vadd.f32 %v173, %v518
    %v520 = vpop.f32.mrf.mxu0
    %v521 = vadd.f32 %v177, %v520
    %522 = vmatprep.mubr.bf16.mxu0 %v135
    %523 = vmatmul.mubr.bf16.gmra.mxu0 %v134
    %v524 = vpop.f32.mrf.mxu0
    %v525 = vadd.f32 %v173, %v524
    %v526 = vpop.f32.mrf.mxu0
    %v527 = vadd.f32 %v177, %v526
    %v528 = vpop.f32.mrf.mxu0
    %v529 = vadd.f32 %v173, %v528
    %v530 = vpop.f32.mrf.mxu0
    %v531 = vadd.f32 %v177, %v530
    %532 = vdwg.mxu0
    %v533 = vadd.f32 %v375, %v379
    %v534 = vadd.f32 %v533, %v385
    %v535 = vadd.f32 %v534, %v389
    %v536 = vadd.f32 %v535, %v395
    %v537 = vadd.f32 %v536, %v399
    %v538 = vadd.f32 %v537, %v405
    %v539 = vadd.f32 %v538, %v409
    %v540 = vadd.f32 %v539, %v415
    %v541 = vadd.f32 %v540, %v419
    %v542 = vadd.f32 %v541, %v425
    %v543 = vadd.f32 %v542, %v429
    %v544 = vadd.f32 %v543, %v435
    %v545 = vadd.f32 %v544, %v439
    %v546 = vadd.f32 %v545, %v445
    %v547 = vadd.f32 %v546, %v449
    %v548 = vadd.f32 %v547, %v455
    %v549 = vadd.f32 %v548, %v459
    %v550 = vadd.f32 %v549, %v465
    %v551 = vadd.f32 %v550, %v469
    %v552 = vadd.f32 %v551, %v475
    %v553 = vadd.f32 %v552, %v479
    %v554 = vadd.f32 %v553, %v485
    %v555 = vadd.f32 %v554, %v489
    %v556 = vadd.f32 %v555, %v495
    %v557 = vadd.f32 %v556, %v499
    %v558 = vadd.f32 %v557, %v505
    %v559 = vadd.f32 %v558, %v509
    %v560 = vadd.f32 %v559, %v515
    %v561 = vadd.f32 %v560, %v519
    %v562 = vadd.f32 %v561, %v525
    %v563 = vadd.f32 %v562, %v529
    %v564 = vrot.slane %v563, 4
    %v565 = vadd.f32 %v563, %v564
    %v566 = vrot.slane %v565, 2
    %v567 = vadd.f32 %v565, %v566
    %v568 = vrot.slane %v567, 1
    %v569 = vadd.f32 %v567, %v568
    %v570 = vadd.f32 %v377, %v381
    %v571 = vadd.f32 %v570, %v387
    %v572 = vadd.f32 %v571, %v391
    %v573 = vadd.f32 %v572, %v397
    %v574 = vadd.f32 %v573, %v401
    %v575 = vadd.f32 %v574, %v407
    %v576 = vadd.f32 %v575, %v411
    %v577 = vadd.f32 %v576, %v417
    %v578 = vadd.f32 %v577, %v421
    %v579 = vadd.f32 %v578, %v427
    %v580 = vadd.f32 %v579, %v431
    %v581 = vadd.f32 %v580, %v437
    %v582 = vadd.f32 %v581, %v441
    %v583 = vadd.f32 %v582, %v447
    %v584 = vadd.f32 %v583, %v451
    %v585 = vadd.f32 %v584, %v457
    %v586 = vadd.f32 %v585, %v461
    %v587 = vadd.f32 %v586, %v467
    %v588 = vadd.f32 %v587, %v471
    %v589 = vadd.f32 %v588, %v477
    %v590 = vadd.f32 %v589, %v481
    %v591 = vadd.f32 %v590, %v487
    %v592 = vadd.f32 %v591, %v491
    %v593 = vadd.f32 %v592, %v497
    %v594 = vadd.f32 %v593, %v501
    %v595 = vadd.f32 %v594, %v507
    %v596 = vadd.f32 %v595, %v511
    %v597 = vadd.f32 %v596, %v517
    %v598 = vadd.f32 %v597, %v521
    %v599 = vadd.f32 %v598, %v527
    %v600 = vadd.f32 %v599, %v531
    %v601 = vrot.slane %v600, 4
    %v602 = vadd.f32 %v600, %v601
    %v603 = vrot.slane %v602, 2
    %v604 = vadd.f32 %v602, %v603
    %v605 = vrot.slane %v604, 1
    %v606 = vadd.f32 %v604, %v605
    %v607 = vrcp.pop 256.0
    %v608 = vmul.f32 %v569, %v607
    %v609 = vmul.f32 %v606, %v607
    %v610 = vmul.f32 %v375, %v375
    %v611 = vmul.f32 %v377, %v377
    %v612 = vmul.f32 %v379, %v379
    %v613 = vmul.f32 %v381, %v381
    %v614 = vmul.f32 %v385, %v385
    %v615 = vmul.f32 %v387, %v387
    %v616 = vmul.f32 %v389, %v389
    %v617 = vmul.f32 %v391, %v391
    %v618 = vmul.f32 %v395, %v395
    %v619 = vmul.f32 %v397, %v397
    %v620 = vmul.f32 %v399, %v399
    %v621 = vmul.f32 %v401, %v401
    %v622 = vmul.f32 %v405, %v405
    %v623 = vmul.f32 %v407, %v407
    %v624 = vmul.f32 %v409, %v409
    %v625 = vmul.f32 %v411, %v411
    %v626 = vmul.f32 %v415, %v415
    %v627 = vmul.f32 %v417, %v417
    %v628 = vmul.f32 %v419, %v419
    %v629 = vmul.f32 %v421, %v421
    %v630 = vmul.f32 %v425, %v425
    %v631 = vmul.f32 %v427, %v427
    %v632 = vmul.f32 %v429, %v429
    %v633 = vmul.f32 %v431, %v431
    %v634 = vmul.f32 %v435, %v435
    %v635 = vmul.f32 %v437, %v437
    %v636 = vmul.f32 %v439, %v439
    %v637 = vmul.f32 %v441, %v441
    %v638 = vmul.f32 %v445, %v445
    %v639 = vmul.f32 %v447, %v447
    %v640 = vmul.f32 %v449, %v449
    %v641 = vmul.f32 %v451, %v451
    %v642 = vmul.f32 %v455, %v455
    %v643 = vmul.f32 %v457, %v457
    %v644 = vmul.f32 %v459, %v459
    %v645 = vmul.f32 %v461, %v461
    %v646 = vmul.f32 %v465, %v465
    %v647 = vmul.f32 %v467, %v467
    %v648 = vmul.f32 %v469, %v469
    %v649 = vmul.f32 %v471, %v471
    %v650 = vmul.f32 %v475, %v475
    %v651 = vmul.f32 %v477, %v477
    %v652 = vmul.f32 %v479, %v479
    %v653 = vmul.f32 %v481, %v481
    %v654 = vmul.f32 %v485, %v485
    %v655 = vmul.f32 %v487, %v487
    %v656 = vmul.f32 %v489, %v489
    %v657 = vmul.f32 %v491, %v491
    %v658 = vmul.f32 %v495, %v495
    %v659 = vmul.f32 %v497, %v497
    %v660 = vmul.f32 %v499, %v499
    %v661 = vmul.f32 %v501, %v501
    %v662 = vmul.f32 %v505, %v505
    %v663 = vmul.f32 %v507, %v507
    %v664 = vmul.f32 %v509, %v509
    %v665 = vmul.f32 %v511, %v511
    %v666 = vmul.f32 %v515, %v515
    %v667 = vmul.f32 %v517, %v517
    %v668 = vmul.f32 %v519, %v519
    %v669 = vmul.f32 %v521, %v521
    %v670 = vmul.f32 %v525, %v525
    %v671 = vmul.f32 %v527, %v527
    %v672 = vmul.f32 %v529, %v529
    %v673 = vmul.f32 %v531, %v531
    %v674 = vadd.f32 %v610, %v612
    %v675 = vadd.f32 %v674, %v614
    %v676 = vadd.f32 %v675, %v616
    %v677 = vadd.f32 %v676, %v618
    %v678 = vadd.f32 %v677, %v620
    %v679 = vadd.f32 %v678, %v622
    %v680 = vadd.f32 %v679, %v624
    %v681 = vadd.f32 %v680, %v626
    %v682 = vadd.f32 %v681, %v628
    %v683 = vadd.f32 %v682, %v630
    %v684 = vadd.f32 %v683, %v632
    %v685 = vadd.f32 %v684, %v634
    %v686 = vadd.f32 %v685, %v636
    %v687 = vadd.f32 %v686, %v638
    %v688 = vadd.f32 %v687, %v640
    %v689 = vadd.f32 %v688, %v642
    %v690 = vadd.f32 %v689, %v644
    %v691 = vadd.f32 %v690, %v646
    %v692 = vadd.f32 %v691, %v648
    %v693 = vadd.f32 %v692, %v650
    %v694 = vadd.f32 %v693, %v652
    %v695 = vadd.f32 %v694, %v654
    %v696 = vadd.f32 %v695, %v656
    %v697 = vadd.f32 %v696, %v658
    %v698 = vadd.f32 %v697, %v660
    %v699 = vadd.f32 %v698, %v662
    %v700 = vadd.f32 %v699, %v664
    %v701 = vadd.f32 %v700, %v666
    %v702 = vadd.f32 %v701, %v668
    %v703 = vadd.f32 %v702, %v670
    %v704 = vadd.f32 %v703, %v672
    %v705 = vrot.slane %v704, 4
    %v706 = vadd.f32 %v704, %v705
    %v707 = vrot.slane %v706, 2
    %v708 = vadd.f32 %v706, %v707
    %v709 = vrot.slane %v708, 1
    %v710 = vadd.f32 %v708, %v709
    %v711 = vadd.f32 %v611, %v613
    %v712 = vadd.f32 %v711, %v615
    %v713 = vadd.f32 %v712, %v617
    %v714 = vadd.f32 %v713, %v619
    %v715 = vadd.f32 %v714, %v621
    %v716 = vadd.f32 %v715, %v623
    %v717 = vadd.f32 %v716, %v625
    %v718 = vadd.f32 %v717, %v627
    %v719 = vadd.f32 %v718, %v629
    %v720 = vadd.f32 %v719, %v631
    %v721 = vadd.f32 %v720, %v633
    %v722 = vadd.f32 %v721, %v635
    %v723 = vadd.f32 %v722, %v637
    %v724 = vadd.f32 %v723, %v639
    %v725 = vadd.f32 %v724, %v641
    %v726 = vadd.f32 %v725, %v643
    %v727 = vadd.f32 %v726, %v645
    %v728 = vadd.f32 %v727, %v647
    %v729 = vadd.f32 %v728, %v649
    %v730 = vadd.f32 %v729, %v651
    %v731 = vadd.f32 %v730, %v653
    %v732 = vadd.f32 %v731, %v655
    %v733 = vadd.f32 %v732, %v657
    %v734 = vadd.f32 %v733, %v659
    %v735 = vadd.f32 %v734, %v661
    %v736 = vadd.f32 %v735, %v663
    %v737 = vadd.f32 %v736, %v665
    %v738 = vadd.f32 %v737, %v667
    %v739 = vadd.f32 %v738, %v669
    %v740 = vadd.f32 %v739, %v671
    %v741 = vadd.f32 %v740, %v673
    %v742 = vrot.slane %v741, 4
    %v743 = vadd.f32 %v741, %v742
    %v744 = vrot.slane %v743, 2
    %v745 = vadd.f32 %v743, %v744
    %v746 = vrot.slane %v745, 1
    %v747 = vadd.f32 %v745, %v746
    %v748 = vmul.f32 %v710, %v607
    %v749 = vmul.f32 %v747, %v607
    %v750 = vmul.f32 %v608, %v608
    %v751 = vmul.f32 %v609, %v609
    %v752 = vsub.f32 %v748, %v750
    %v753 = vsub.f32 %v749, %v751
    %v754 = vmax.f32 %v752, 0.0
    %v755 = vmax.f32 %v753, 0.0
    %v756 = vld [vmem:[%s3] sm:$0x3]
    %v757 = vadd.f32 %v754, 1e-05
    %v758 = vadd.f32 %v755, 1e-05
    %v759 = vrsqrt.pop %v757
    %v760 = vrsqrt.pop %v758
    %v763 = vcombine.low %v759, %v760
    %v765 = vunpack.c.l.s4 1966171168
    %v766 = vunpack.c.0.s8 %v765
    %v767 = vlaneseq
    %v768 = vshrl.u32 %v767, 7
    %v769 = vsub.s32 %v766, %v768
    %v770 = vrot.slane %v763, %v769
    %v772 = vunpack.c.l.s4 1966171168
    %v773 = vunpack.c.0.s8 %v772
    %v774 = vlaneseq
    %v775 = vshrl.u32 %v774, 7
    %v776 = vsub.s32 %v773, %v775
    %v777 = vrot.slane %v770, %v776
    %v779 = vmul.f32 %v756, %v777
    %v780 = vld [vmem:[%s4] sm:$0x3]
    %v782 = vlaneseq
    %v783 = vshrl.u32 %v782, 7
    %v784 = vsub.s32 0, %v783
    %v785 = vrot.slane %v779, %v784
    %v786 = vlaneseq
    %v787 = vshrl.u32 %v786, 7
    %v788 = vsub.s32 1, %v787
    %v789 = vrot.slane %v779, %v788
    %v792 = vmul.f32 %v608, %v785
    %v793 = vmul.f32 %v609, %v789
    %v796 = vcombine.low %v792, %v793
    %v798 = vunpack.c.l.s4 1966171168
    %v799 = vunpack.c.0.s8 %v798
    %v800 = vlaneseq
    %v801 = vshrl.u32 %v800, 7
    %v802 = vsub.s32 %v799, %v801
    %v803 = vrot.slane %v796, %v802
    %v805 = vunpack.c.l.s4 1966171168
    %v806 = vunpack.c.0.s8 %v805
    %v807 = vlaneseq
    %v808 = vshrl.u32 %v807, 7
    %v809 = vsub.s32 %v806, %v808
    %v810 = vrot.slane %v803, %v809
    %v812 = vsub.f32 %v780, %v810
    %v813 = vmul.f32 %v375, %v785
    %v814 = vmul.f32 %v377, %v789
    %v815 = vmul.f32 %v379, %v785
    %v816 = vmul.f32 %v381, %v789
    %v817 = vmul.f32 %v385, %v785
    %v818 = vmul.f32 %v387, %v789
    %v819 = vmul.f32 %v389, %v785
    %v820 = vmul.f32 %v391, %v789
    %v821 = vmul.f32 %v395, %v785
    %v822 = vmul.f32 %v397, %v789
    %v823 = vmul.f32 %v399, %v785
    %v824 = vmul.f32 %v401, %v789
    %v825 = vmul.f32 %v405, %v785
    %v826 = vmul.f32 %v407, %v789
    %v827 = vmul.f32 %v409, %v785
    %v828 = vmul.f32 %v411, %v789
    %v829 = vmul.f32 %v415, %v785
    %v830 = vmul.f32 %v417, %v789
    %v831 = vmul.f32 %v419, %v785
    %v832 = vmul.f32 %v421, %v789
    %v833 = vmul.f32 %v425, %v785
    %v834 = vmul.f32 %v427, %v789
    %v835 = vmul.f32 %v429, %v785
    %v836 = vmul.f32 %v431, %v789
    %v837 = vmul.f32 %v435, %v785
    %v838 = vmul.f32 %v437, %v789
    %v839 = vmul.f32 %v439, %v785
    %v840 = vmul.f32 %v441, %v789
    %v841 = vmul.f32 %v445, %v785
    %v842 = vmul.f32 %v447, %v789
    %v843 = vmul.f32 %v449, %v785
    %v844 = vmul.f32 %v451, %v789
    %v845 = vmul.f32 %v455, %v785
    %v846 = vmul.f32 %v457, %v789
    %v847 = vmul.f32 %v459, %v785
    %v848 = vmul.f32 %v461, %v789
    %v849 = vmul.f32 %v465, %v785
    %v850 = vmul.f32 %v467, %v789
    %v851 = vmul.f32 %v469, %v785
    %v852 = vmul.f32 %v471, %v789
    %v853 = vmul.f32 %v475, %v785
    %v854 = vmul.f32 %v477, %v789
    %v855 = vmul.f32 %v479, %v785
    %v856 = vmul.f32 %v481, %v789
    %v857 = vmul.f32 %v485, %v785
    %v858 = vmul.f32 %v487, %v789
    %v859 = vmul.f32 %v489, %v785
    %v860 = vmul.f32 %v491, %v789
    %v861 = vmul.f32 %v495, %v785
    %v862 = vmul.f32 %v497, %v789
    %v863 = vmul.f32 %v499, %v785
    %v864 = vmul.f32 %v501, %v789
    %v865 = vmul.f32 %v505, %v785
    %v866 = vmul.f32 %v507, %v789
    %v867 = vmul.f32 %v509, %v785
    %v868 = vmul.f32 %v511, %v789
    %v869 = vmul.f32 %v515, %v785
    %v870 = vmul.f32 %v517, %v789
    %v871 = vmul.f32 %v519, %v785
    %v872 = vmul.f32 %v521, %v789
    %v873 = vmul.f32 %v525, %v785
    %v874 = vmul.f32 %v527, %v789
    %v875 = vmul.f32 %v529, %v785
    %v876 = vmul.f32 %v531, %v789
    %v878 = vlaneseq
    %v879 = vshrl.u32 %v878, 7
    %v880 = vsub.s32 0, %v879
    %v881 = vrot.slane %v812, %v880
    %v882 = vlaneseq
    %v883 = vshrl.u32 %v882, 7
    %v884 = vsub.s32 1, %v883
    %v885 = vrot.slane %v812, %v884
    %v888 = vadd.f32 %v813, %v881
    %v889 = vadd.f32 %v814, %v885
    %v890 = vadd.f32 %v815, %v881
    %v891 = vadd.f32 %v816, %v885
    %v892 = vadd.f32 %v817, %v881
    %v893 = vadd.f32 %v818, %v885
    %v894 = vadd.f32 %v819, %v881
    %v895 = vadd.f32 %v820, %v885
    %v896 = vadd.f32 %v821, %v881
    %v897 = vadd.f32 %v822, %v885
    %v898 = vadd.f32 %v823, %v881
    %v899 = vadd.f32 %v824, %v885
    %v900 = vadd.f32 %v825, %v881
    %v901 = vadd.f32 %v826, %v885
    %v902 = vadd.f32 %v827, %v881
    %v903 = vadd.f32 %v828, %v885
    %v904 = vadd.f32 %v829, %v881
    %v905 = vadd.f32 %v830, %v885
    %v906 = vadd.f32 %v831, %v881
    %v907 = vadd.f32 %v832, %v885
    %v908 = vadd.f32 %v833, %v881
    %v909 = vadd.f32 %v834, %v885
    %v910 = vadd.f32 %v835, %v881
    %v911 = vadd.f32 %v836, %v885
    %v912 = vadd.f32 %v837, %v881
    %v913 = vadd.f32 %v838, %v885
    %v914 = vadd.f32 %v839, %v881
    %v915 = vadd.f32 %v840, %v885
    %v916 = vadd.f32 %v841, %v881
    %v917 = vadd.f32 %v842, %v885
    %v918 = vadd.f32 %v843, %v881
    %v919 = vadd.f32 %v844, %v885
    %v920 = vadd.f32 %v845, %v881
    %v921 = vadd.f32 %v846, %v885
    %v922 = vadd.f32 %v847, %v881
    %v923 = vadd.f32 %v848, %v885
    %v924 = vadd.f32 %v849, %v881
    %v925 = vadd.f32 %v850, %v885
    %v926 = vadd.f32 %v851, %v881
    %v927 = vadd.f32 %v852, %v885
    %v928 = vadd.f32 %v853, %v881
    %v929 = vadd.f32 %v854, %v885
    %v930 = vadd.f32 %v855, %v881
    %v931 = vadd.f32 %v856, %v885
    %v932 = vadd.f32 %v857, %v881
    %v933 = vadd.f32 %v858, %v885
    %v934 = vadd.f32 %v859, %v881
    %v935 = vadd.f32 %v860, %v885
    %v936 = vadd.f32 %v861, %v881
    %v937 = vadd.f32 %v862, %v885
    %v938 = vadd.f32 %v863, %v881
    %v939 = vadd.f32 %v864, %v885
    %v940 = vadd.f32 %v865, %v881
    %v941 = vadd.f32 %v866, %v885
    %v942 = vadd.f32 %v867, %v881
    %v943 = vadd.f32 %v868, %v885
    %v944 = vadd.f32 %v869, %v881
    %v945 = vadd.f32 %v870, %v885
    %v946 = vadd.f32 %v871, %v881
    %v947 = vadd.f32 %v872, %v885
    %v948 = vadd.f32 %v873, %v881
    %v949 = vadd.f32 %v874, %v885
    %v950 = vadd.f32 %v875, %v881
    %v951 = vadd.f32 %v876, %v885
    %v952 = vmax.f32 %v888, 0.0
    %v953 = vmax.f32 %v889, 0.0
    %v954 = vmax.f32 %v890, 0.0
    %v955 = vmax.f32 %v891, 0.0
    %v956 = vmax.f32 %v892, 0.0
    %v957 = vmax.f32 %v893, 0.0
    %v958 = vmax.f32 %v894, 0.0
    %v959 = vmax.f32 %v895, 0.0
    %v960 = vmax.f32 %v896, 0.0
    %v961 = vmax.f32 %v897, 0.0
    %v962 = vmax.f32 %v898, 0.0
    %v963 = vmax.f32 %v899, 0.0
    %v964 = vmax.f32 %v900, 0.0
    %v965 = vmax.f32 %v901, 0.0
    %v966 = vmax.f32 %v902, 0.0
    %v967 = vmax.f32 %v903, 0.0
    %v968 = vmax.f32 %v904, 0.0
    %v969 = vmax.f32 %v905, 0.0
    %v970 = vmax.f32 %v906, 0.0
    %v971 = vmax.f32 %v907, 0.0
    %v972 = vmax.f32 %v908, 0.0
    %v973 = vmax.f32 %v909, 0.0
    %v974 = vmax.f32 %v910, 0.0
    %v975 = vmax.f32 %v911, 0.0
    %v976 = vmax.f32 %v912, 0.0
    %v977 = vmax.f32 %v913, 0.0
    %v978 = vmax.f32 %v914, 0.0
    %v979 = vmax.f32 %v915, 0.0
    %v980 = vmax.f32 %v916, 0.0
    %v981 = vmax.f32 %v917, 0.0
    %v982 = vmax.f32 %v918, 0.0
    %v983 = vmax.f32 %v919, 0.0
    %v984 = vmax.f32 %v920, 0.0
    %v985 = vmax.f32 %v921, 0.0
    %v986 = vmax.f32 %v922, 0.0
    %v987 = vmax.f32 %v923, 0.0
    %v988 = vmax.f32 %v924, 0.0
    %v989 = vmax.f32 %v925, 0.0
    %v990 = vmax.f32 %v926, 0.0
    %v991 = vmax.f32 %v927, 0.0
    %v992 = vmax.f32 %v928, 0.0
    %v993 = vmax.f32 %v929, 0.0
    %v994 = vmax.f32 %v930, 0.0
    %v995 = vmax.f32 %v931, 0.0
    %v996 = vmax.f32 %v932, 0.0
    %v997 = vmax.f32 %v933, 0.0
    %v998 = vmax.f32 %v934, 0.0
    %v999 = vmax.f32 %v935, 0.0
    %v1000 = vmax.f32 %v936, 0.0
    %v1001 = vmax.f32 %v937, 0.0
    %v1002 = vmax.f32 %v938, 0.0
    %v1003 = vmax.f32 %v939, 0.0
    %v1004 = vmax.f32 %v940, 0.0
    %v1005 = vmax.f32 %v941, 0.0
    %v1006 = vmax.f32 %v942, 0.0
    %v1007 = vmax.f32 %v943, 0.0
    %v1008 = vmax.f32 %v944, 0.0
    %v1009 = vmax.f32 %v945, 0.0
    %v1010 = vmax.f32 %v946, 0.0
    %v1011 = vmax.f32 %v947, 0.0
    %v1012 = vmax.f32 %v948, 0.0
    %v1013 = vmax.f32 %v949, 0.0
    %v1014 = vmax.f32 %v950, 0.0
    %v1015 = vmax.f32 %v951, 0.0
    %v1016 = vpack.c.bf16 %v954, %v952
    %v1017 = vpack.c.bf16 %v955, %v953
    %v1018 = vpack.c.bf16 %v958, %v956
    %v1019 = vpack.c.bf16 %v959, %v957
    %v1020 = vpack.c.bf16 %v962, %v960
    %v1021 = vpack.c.bf16 %v963, %v961
    %v1022 = vpack.c.bf16 %v966, %v964
    %v1023 = vpack.c.bf16 %v967, %v965
    %v1024 = vpack.c.bf16 %v970, %v968
    %v1025 = vpack.c.bf16 %v971, %v969
    %v1026 = vpack.c.bf16 %v974, %v972
    %v1027 = vpack.c.bf16 %v975, %v973
    %v1028 = vpack.c.bf16 %v978, %v976
    %v1029 = vpack.c.bf16 %v979, %v977
    %v1030 = vpack.c.bf16 %v982, %v980
    %v1031 = vpack.c.bf16 %v983, %v981
    %v1032 = vpack.c.bf16 %v986, %v984
    %v1033 = vpack.c.bf16 %v987, %v985
    %v1034 = vpack.c.bf16 %v990, %v988
    %v1035 = vpack.c.bf16 %v991, %v989
    %v1036 = vpack.c.bf16 %v994, %v992
    %v1037 = vpack.c.bf16 %v995, %v993
    %v1038 = vpack.c.bf16 %v998, %v996
    %v1039 = vpack.c.bf16 %v999, %v997
    %v1040 = vpack.c.bf16 %v1002, %v1000
    %v1041 = vpack.c.bf16 %v1003, %v1001
    %v1042 = vpack.c.bf16 %v1006, %v1004
    %v1043 = vpack.c.bf16 %v1007, %v1005
    %v1044 = vpack.c.bf16 %v1010, %v1008
    %v1045 = vpack.c.bf16 %v1011, %v1009
    %v1046 = vpack.c.bf16 %v1014, %v1012
    %v1047 = vpack.c.bf16 %v1015, %v1013
    %v1048 = vld [vmem:[%s5] sm:$0xff]
    %v1049 = vld [vmem:[%s5 + $0x8] sm:$0xff]
    %v1050 = vld [vmem:[%s5 + $0x10] sm:$0xff]
    %v1051 = vld [vmem:[%s5 + $0x18] sm:$0xff]
    %v1052 = vld [vmem:[%s5 + $0x20] sm:$0xff]
    %v1053 = vld [vmem:[%s5 + $0x28] sm:$0xff]
    %v1054 = vld [vmem:[%s5 + $0x30] sm:$0xff]
    %v1055 = vld [vmem:[%s5 + $0x38] sm:$0xff]
    %v1056 = vld [vmem:[%s5 + $0x40] sm:$0xff]
    %v1057 = vld [vmem:[%s5 + $0x48] sm:$0xff]
    %v1058 = vld [vmem:[%s5 + $0x50] sm:$0xff]
    %v1059 = vld [vmem:[%s5 + $0x58] sm:$0xff]
    %v1060 = vld [vmem:[%s5 + $0x60] sm:$0xff]
    %v1061 = vld [vmem:[%s5 + $0x68] sm:$0xff]
    %v1062 = vld [vmem:[%s5 + $0x70] sm:$0xff]
    %v1063 = vld [vmem:[%s5 + $0x78] sm:$0xff]
    %v1064 = vld [vmem:[%s5 + $0x80] sm:$0xff]
    %v1065 = vld [vmem:[%s5 + $0x88] sm:$0xff]
    %v1066 = vld [vmem:[%s5 + $0x90] sm:$0xff]
    %v1067 = vld [vmem:[%s5 + $0x98] sm:$0xff]
    %v1068 = vld [vmem:[%s5 + $0xa0] sm:$0xff]
    %v1069 = vld [vmem:[%s5 + $0xa8] sm:$0xff]
    %v1070 = vld [vmem:[%s5 + $0xb0] sm:$0xff]
    %v1071 = vld [vmem:[%s5 + $0xb8] sm:$0xff]
    %v1072 = vld [vmem:[%s5 + $0xc0] sm:$0xff]
    %v1073 = vld [vmem:[%s5 + $0xc8] sm:$0xff]
    %v1074 = vld [vmem:[%s5 + $0xd0] sm:$0xff]
    %v1075 = vld [vmem:[%s5 + $0xd8] sm:$0xff]
    %v1076 = vld [vmem:[%s5 + $0xe0] sm:$0xff]
    %v1077 = vld [vmem:[%s5 + $0xe8] sm:$0xff]
    %v1078 = vld [vmem:[%s5 + $0xf0] sm:$0xff]
    %v1079 = vld [vmem:[%s5 + $0xf8] sm:$0xff]
    %v1080 = vld [vmem:[%s6] sm:$0x3]
    %v1082 = vlaneseq
    %v1083 = vshrl.u32 %v1082, 7
    %v1084 = vsub.s32 0, %v1083
    %v1085 = vrot.slane %v1080, %v1084
    %v1086 = vlaneseq
    %v1087 = vshrl.u32 %v1086, 7
    %v1088 = vsub.s32 1, %v1087
    %v1089 = vrot.slane %v1080, %v1088
    %v1124 = vunpack.c.l.b16 %v1048
    %v1125 = vunpack.c.h.b16 %v1048
    %v1126 = vunpack.c.l.b16 %v1049
    %v1127 = vunpack.c.h.b16 %v1049
    %v1128 = vunpack.c.l.b16 %v1050
    %v1129 = vunpack.c.h.b16 %v1050
    %v1130 = vunpack.c.l.b16 %v1051
    %v1131 = vunpack.c.h.b16 %v1051
    %v1132 = vunpack.c.l.b16 %v1052
    %v1133 = vunpack.c.h.b16 %v1052
    %v1134 = vunpack.c.l.b16 %v1053
    %v1135 = vunpack.c.h.b16 %v1053
    %v1136 = vunpack.c.l.b16 %v1054
    %v1137 = vunpack.c.h.b16 %v1054
    %v1138 = vunpack.c.l.b16 %v1055
    %v1139 = vunpack.c.h.b16 %v1055
    %v1140 = vunpack.c.l.b16 %v1056
    %v1141 = vunpack.c.h.b16 %v1056
    %v1142 = vunpack.c.l.b16 %v1057
    %v1143 = vunpack.c.h.b16 %v1057
    %v1144 = vunpack.c.l.b16 %v1058
    %v1145 = vunpack.c.h.b16 %v1058
    %v1146 = vunpack.c.l.b16 %v1059
    %v1147 = vunpack.c.h.b16 %v1059
    %v1148 = vunpack.c.l.b16 %v1060
    %v1149 = vunpack.c.h.b16 %v1060
    %v1150 = vunpack.c.l.b16 %v1061
    %v1151 = vunpack.c.h.b16 %v1061
    %v1152 = vunpack.c.l.b16 %v1062
    %v1153 = vunpack.c.h.b16 %v1062
    %v1154 = vunpack.c.l.b16 %v1063
    %v1155 = vunpack.c.h.b16 %v1063
    %v1156 = vunpack.c.l.b16 %v1064
    %v1157 = vunpack.c.h.b16 %v1064
    %v1158 = vunpack.c.l.b16 %v1065
    %v1159 = vunpack.c.h.b16 %v1065
    %v1160 = vunpack.c.l.b16 %v1066
    %v1161 = vunpack.c.h.b16 %v1066
    %v1162 = vunpack.c.l.b16 %v1067
    %v1163 = vunpack.c.h.b16 %v1067
    %v1164 = vunpack.c.l.b16 %v1068
    %v1165 = vunpack.c.h.b16 %v1068
    %v1166 = vunpack.c.l.b16 %v1069
    %v1167 = vunpack.c.h.b16 %v1069
    %v1168 = vunpack.c.l.b16 %v1070
    %v1169 = vunpack.c.h.b16 %v1070
    %v1170 = vunpack.c.l.b16 %v1071
    %v1171 = vunpack.c.h.b16 %v1071
    %v1172 = vunpack.c.l.b16 %v1072
    %v1173 = vunpack.c.h.b16 %v1072
    %v1174 = vunpack.c.l.b16 %v1073
    %v1175 = vunpack.c.h.b16 %v1073
    %v1176 = vunpack.c.l.b16 %v1074
    %v1177 = vunpack.c.h.b16 %v1074
    %v1178 = vunpack.c.l.b16 %v1075
    %v1179 = vunpack.c.h.b16 %v1075
    %v1180 = vunpack.c.l.b16 %v1076
    %v1181 = vunpack.c.h.b16 %v1076
    %v1182 = vunpack.c.l.b16 %v1077
    %v1183 = vunpack.c.h.b16 %v1077
    %v1184 = vunpack.c.l.b16 %v1078
    %v1185 = vunpack.c.h.b16 %v1078
    %v1186 = vunpack.c.l.b16 %v1079
    %v1187 = vunpack.c.h.b16 %v1079
    %v1188 = vpack.c.b16 %v1126, %v1124
    %v1189 = vpack.c.b16 %v1127, %v1125
    %v1190 = vpack.c.b16 %v1130, %v1128
    %v1191 = vpack.c.b16 %v1131, %v1129
    %v1192 = vpack.c.b16 %v1134, %v1132
    %v1193 = vpack.c.b16 %v1135, %v1133
    %v1194 = vpack.c.b16 %v1138, %v1136
    %v1195 = vpack.c.b16 %v1139, %v1137
    %v1196 = vpack.c.b16 %v1142, %v1140
    %v1197 = vpack.c.b16 %v1143, %v1141
    %v1198 = vpack.c.b16 %v1146, %v1144
    %v1199 = vpack.c.b16 %v1147, %v1145
    %v1200 = vpack.c.b16 %v1150, %v1148
    %v1201 = vpack.c.b16 %v1151, %v1149
    %v1202 = vpack.c.b16 %v1154, %v1152
    %v1203 = vpack.c.b16 %v1155, %v1153
    %v1204 = vpack.c.b16 %v1158, %v1156
    %v1205 = vpack.c.b16 %v1159, %v1157
    %v1206 = vpack.c.b16 %v1162, %v1160
    %v1207 = vpack.c.b16 %v1163, %v1161
    %v1208 = vpack.c.b16 %v1166, %v1164
    %v1209 = vpack.c.b16 %v1167, %v1165
    %v1210 = vpack.c.b16 %v1170, %v1168
    %v1211 = vpack.c.b16 %v1171, %v1169
    %v1212 = vpack.c.b16 %v1174, %v1172
    %v1213 = vpack.c.b16 %v1175, %v1173
    %v1214 = vpack.c.b16 %v1178, %v1176
    %v1215 = vpack.c.b16 %v1179, %v1177
    %v1216 = vpack.c.b16 %v1182, %v1180
    %v1217 = vpack.c.b16 %v1183, %v1181
    %v1218 = vpack.c.b16 %v1186, %v1184
    %v1219 = vpack.c.b16 %v1187, %v1185
    %1252 = vmatprep.subr.bf16.mxu0 %v1203
    %1253 = vmatpush1.bf16.msra.mxu0 %v1202
    %1254 = vmatprep.subr.bf16.mxu0 %v1201
    %1255 = vmatpush1.bf16.msra.mxu0 %v1200
    %1256 = vmatprep.subr.bf16.mxu0 %v1199
    %1257 = vmatpush1.bf16.msra.mxu0 %v1198
    %1258 = vmatprep.subr.bf16.mxu0 %v1197
    %1259 = vmatpush1.bf16.msra.mxu0 %v1196
    %1260 = vmatprep.subr.bf16.mxu0 %v1195
    %1261 = vmatpush1.bf16.msra.mxu0 %v1194
    %1262 = vmatprep.subr.bf16.mxu0 %v1193
    %1263 = vmatpush1.bf16.msra.mxu0 %v1192
    %1264 = vmatprep.subr.bf16.mxu0 %v1191
    %1265 = vmatpush1.bf16.msra.mxu0 %v1190
    %1266 = vmatprep.subr.bf16.mxu0 %v1189
    %1267 = vmatpush1.bf16.msra.mxu0 %v1188
    %1268 = vmatprep.subr.bf16.mxu0 %v1219
    %1269 = vmatpush2.bf16.msra.mxu0 %v1218
    %1270 = vmatprep.subr.bf16.mxu0 %v1217
    %1271 = vmatpush2.bf16.msra.mxu0 %v1216
    %1272 = vmatprep.subr.bf16.mxu0 %v1215
    %1273 = vmatpush2.bf16.msra.mxu0 %v1214
    %1274 = vmatprep.subr.bf16.mxu0 %v1213
    %1275 = vmatpush2.bf16.msra.mxu0 %v1212
    %1276 = vmatprep.subr.bf16.mxu0 %v1211
    %1277 = vmatpush2.bf16.msra.mxu0 %v1210
    %1278 = vmatprep.subr.bf16.mxu0 %v1209
    %1279 = vmatpush2.bf16.msra.mxu0 %v1208
    %1280 = vmatprep.subr.bf16.mxu0 %v1207
    %1281 = vmatpush2.bf16.msra.mxu0 %v1206
    %1282 = vmatprep.subr.bf16.mxu0 %v1205
    %1283 = vmatpush2.bf16.msra.mxu0 %v1204
    %1284 = vmatprep.mubr.bf16.mxu0 %v1017
    %1285 = vmatmul.mubr.bf16.gmra.mxu0 %v1016
    %v1286 = vpop.f32.mrf.mxu0
    %v1287 = vadd.f32 %v1085, %v1286
    %v1288 = vpop.f32.mrf.mxu0
    %v1289 = vadd.f32 %v1089, %v1288
    %v1290 = vpop.f32.mrf.mxu0
    %v1291 = vadd.f32 %v1085, %v1290
    %v1292 = vpop.f32.mrf.mxu0
    %v1293 = vadd.f32 %v1089, %v1292
    %1294 = vmatprep.mubr.bf16.mxu0 %v1019
    %1295 = vmatmul.mubr.bf16.gmra.mxu0 %v1018
    %v1296 = vpop.f32.mrf.mxu0
    %v1297 = vadd.f32 %v1085, %v1296
    %v1298 = vpop.f32.mrf.mxu0
    %v1299 = vadd.f32 %v1089, %v1298
    %v1300 = vpop.f32.mrf.mxu0
    %v1301 = vadd.f32 %v1085, %v1300
    %v1302 = vpop.f32.mrf.mxu0
    %v1303 = vadd.f32 %v1089, %v1302
    %1304 = vmatprep.mubr.bf16.mxu0 %v1021
    %1305 = vmatmul.mubr.bf16.gmra.mxu0 %v1020
    %v1306 = vpop.f32.mrf.mxu0
    %v1307 = vadd.f32 %v1085, %v1306
    %v1308 = vpop.f32.mrf.mxu0
    %v1309 = vadd.f32 %v1089, %v1308
    %v1310 = vpop.f32.mrf.mxu0
    %v1311 = vadd.f32 %v1085, %v1310
    %v1312 = vpop.f32.mrf.mxu0
    %v1313 = vadd.f32 %v1089, %v1312
    %1314 = vmatprep.mubr.bf16.mxu0 %v1023
    %1315 = vmatmul.mubr.bf16.gmra.mxu0 %v1022
    %v1316 = vpop.f32.mrf.mxu0
    %v1317 = vadd.f32 %v1085, %v1316
    %v1318 = vpop.f32.mrf.mxu0
    %v1319 = vadd.f32 %v1089, %v1318
    %v1320 = vpop.f32.mrf.mxu0
    %v1321 = vadd.f32 %v1085, %v1320
    %v1322 = vpop.f32.mrf.mxu0
    %v1323 = vadd.f32 %v1089, %v1322
    %1324 = vmatprep.mubr.bf16.mxu0 %v1025
    %1325 = vmatmul.mubr.bf16.gmra.mxu0 %v1024
    %v1326 = vpop.f32.mrf.mxu0
    %v1327 = vadd.f32 %v1085, %v1326
    %v1328 = vpop.f32.mrf.mxu0
    %v1329 = vadd.f32 %v1089, %v1328
    %v1330 = vpop.f32.mrf.mxu0
    %v1331 = vadd.f32 %v1085, %v1330
    %v1332 = vpop.f32.mrf.mxu0
    %v1333 = vadd.f32 %v1089, %v1332
    %1334 = vmatprep.mubr.bf16.mxu0 %v1027
    %1335 = vmatmul.mubr.bf16.gmra.mxu0 %v1026
    %v1336 = vpop.f32.mrf.mxu0
    %v1337 = vadd.f32 %v1085, %v1336
    %v1338 = vpop.f32.mrf.mxu0
    %v1339 = vadd.f32 %v1089, %v1338
    %v1340 = vpop.f32.mrf.mxu0
    %v1341 = vadd.f32 %v1085, %v1340
    %v1342 = vpop.f32.mrf.mxu0
    %v1343 = vadd.f32 %v1089, %v1342
    %1344 = vmatprep.mubr.bf16.mxu0 %v1029
    %1345 = vmatmul.mubr.bf16.gmra.mxu0 %v1028
    %v1346 = vpop.f32.mrf.mxu0
    %v1347 = vadd.f32 %v1085, %v1346
    %v1348 = vpop.f32.mrf.mxu0
    %v1349 = vadd.f32 %v1089, %v1348
    %v1350 = vpop.f32.mrf.mxu0
    %v1351 = vadd.f32 %v1085, %v1350
    %v1352 = vpop.f32.mrf.mxu0
    %v1353 = vadd.f32 %v1089, %v1352
    %1354 = vmatprep.mubr.bf16.mxu0 %v1031
    %1355 = vmatmul.mubr.bf16.gmra.mxu0 %v1030
    %v1356 = vpop.f32.mrf.mxu0
    %v1357 = vadd.f32 %v1085, %v1356
    %v1358 = vpop.f32.mrf.mxu0
    %v1359 = vadd.f32 %v1089, %v1358
    %v1360 = vpop.f32.mrf.mxu0
    %v1361 = vadd.f32 %v1085, %v1360
    %v1362 = vpop.f32.mrf.mxu0
    %v1363 = vadd.f32 %v1089, %v1362
    %1364 = vmatprep.mubr.bf16.mxu0 %v1033
    %1365 = vmatmul.mubr.bf16.gmra.mxu0 %v1032
    %v1366 = vpop.f32.mrf.mxu0
    %v1367 = vadd.f32 %v1085, %v1366
    %v1368 = vpop.f32.mrf.mxu0
    %v1369 = vadd.f32 %v1089, %v1368
    %v1370 = vpop.f32.mrf.mxu0
    %v1371 = vadd.f32 %v1085, %v1370
    %v1372 = vpop.f32.mrf.mxu0
    %v1373 = vadd.f32 %v1089, %v1372
    %1374 = vmatprep.mubr.bf16.mxu0 %v1035
    %1375 = vmatmul.mubr.bf16.gmra.mxu0 %v1034
    %v1376 = vpop.f32.mrf.mxu0
    %v1377 = vadd.f32 %v1085, %v1376
    %v1378 = vpop.f32.mrf.mxu0
    %v1379 = vadd.f32 %v1089, %v1378
    %v1380 = vpop.f32.mrf.mxu0
    %v1381 = vadd.f32 %v1085, %v1380
    %v1382 = vpop.f32.mrf.mxu0
    %v1383 = vadd.f32 %v1089, %v1382
    %1384 = vmatprep.mubr.bf16.mxu0 %v1037
    %1385 = vmatmul.mubr.bf16.gmra.mxu0 %v1036
    %v1386 = vpop.f32.mrf.mxu0
    %v1387 = vadd.f32 %v1085, %v1386
    %v1388 = vpop.f32.mrf.mxu0
    %v1389 = vadd.f32 %v1089, %v1388
    %v1390 = vpop.f32.mrf.mxu0
    %v1391 = vadd.f32 %v1085, %v1390
    %v1392 = vpop.f32.mrf.mxu0
    %v1393 = vadd.f32 %v1089, %v1392
    %1394 = vmatprep.mubr.bf16.mxu0 %v1039
    %1395 = vmatmul.mubr.bf16.gmra.mxu0 %v1038
    %v1396 = vpop.f32.mrf.mxu0
    %v1397 = vadd.f32 %v1085, %v1396
    %v1398 = vpop.f32.mrf.mxu0
    %v1399 = vadd.f32 %v1089, %v1398
    %v1400 = vpop.f32.mrf.mxu0
    %v1401 = vadd.f32 %v1085, %v1400
    %v1402 = vpop.f32.mrf.mxu0
    %v1403 = vadd.f32 %v1089, %v1402
    %1404 = vmatprep.mubr.bf16.mxu0 %v1041
    %1405 = vmatmul.mubr.bf16.gmra.mxu0 %v1040
    %v1406 = vpop.f32.mrf.mxu0
    %v1407 = vadd.f32 %v1085, %v1406
    %v1408 = vpop.f32.mrf.mxu0
    %v1409 = vadd.f32 %v1089, %v1408
    %v1410 = vpop.f32.mrf.mxu0
    %v1411 = vadd.f32 %v1085, %v1410
    %v1412 = vpop.f32.mrf.mxu0
    %v1413 = vadd.f32 %v1089, %v1412
    %1414 = vmatprep.mubr.bf16.mxu0 %v1043
    %1415 = vmatmul.mubr.bf16.gmra.mxu0 %v1042
    %v1416 = vpop.f32.mrf.mxu0
    %v1417 = vadd.f32 %v1085, %v1416
    %v1418 = vpop.f32.mrf.mxu0
    %v1419 = vadd.f32 %v1089, %v1418
    %v1420 = vpop.f32.mrf.mxu0
    %v1421 = vadd.f32 %v1085, %v1420
    %v1422 = vpop.f32.mrf.mxu0
    %v1423 = vadd.f32 %v1089, %v1422
    %1424 = vmatprep.mubr.bf16.mxu0 %v1045
    %1425 = vmatmul.mubr.bf16.gmra.mxu0 %v1044
    %v1426 = vpop.f32.mrf.mxu0
    %v1427 = vadd.f32 %v1085, %v1426
    %v1428 = vpop.f32.mrf.mxu0
    %v1429 = vadd.f32 %v1089, %v1428
    %v1430 = vpop.f32.mrf.mxu0
    %v1431 = vadd.f32 %v1085, %v1430
    %v1432 = vpop.f32.mrf.mxu0
    %v1433 = vadd.f32 %v1089, %v1432
    %1434 = vmatprep.mubr.bf16.mxu0 %v1047
    %1435 = vmatmul.mubr.bf16.gmra.mxu0 %v1046
    %v1436 = vpop.f32.mrf.mxu0
    %v1437 = vadd.f32 %v1085, %v1436
    %v1438 = vpop.f32.mrf.mxu0
    %v1439 = vadd.f32 %v1089, %v1438
    %v1440 = vpop.f32.mrf.mxu0
    %v1441 = vadd.f32 %v1085, %v1440
    %v1442 = vpop.f32.mrf.mxu0
    %v1443 = vadd.f32 %v1089, %v1442
    %1444 = vdwg.mxu0
    %v1445 = vadd.f32 %v1287, %v1291
    %v1446 = vadd.f32 %v1445, %v1297
    %v1447 = vadd.f32 %v1446, %v1301
    %v1448 = vadd.f32 %v1447, %v1307
    %v1449 = vadd.f32 %v1448, %v1311
    %v1450 = vadd.f32 %v1449, %v1317
    %v1451 = vadd.f32 %v1450, %v1321
    %v1452 = vadd.f32 %v1451, %v1327
    %v1453 = vadd.f32 %v1452, %v1331
    %v1454 = vadd.f32 %v1453, %v1337
    %v1455 = vadd.f32 %v1454, %v1341
    %v1456 = vadd.f32 %v1455, %v1347
    %v1457 = vadd.f32 %v1456, %v1351
    %v1458 = vadd.f32 %v1457, %v1357
    %v1459 = vadd.f32 %v1458, %v1361
    %v1460 = vadd.f32 %v1459, %v1367
    %v1461 = vadd.f32 %v1460, %v1371
    %v1462 = vadd.f32 %v1461, %v1377
    %v1463 = vadd.f32 %v1462, %v1381
    %v1464 = vadd.f32 %v1463, %v1387
    %v1465 = vadd.f32 %v1464, %v1391
    %v1466 = vadd.f32 %v1465, %v1397
    %v1467 = vadd.f32 %v1466, %v1401
    %v1468 = vadd.f32 %v1467, %v1407
    %v1469 = vadd.f32 %v1468, %v1411
    %v1470 = vadd.f32 %v1469, %v1417
    %v1471 = vadd.f32 %v1470, %v1421
    %v1472 = vadd.f32 %v1471, %v1427
    %v1473 = vadd.f32 %v1472, %v1431
    %v1474 = vadd.f32 %v1473, %v1437
    %v1475 = vadd.f32 %v1474, %v1441
    %v1476 = vrot.slane %v1475, 4
    %v1477 = vadd.f32 %v1475, %v1476
    %v1478 = vrot.slane %v1477, 2
    %v1479 = vadd.f32 %v1477, %v1478
    %v1480 = vrot.slane %v1479, 1
    %v1481 = vadd.f32 %v1479, %v1480
    %v1482 = vadd.f32 %v1289, %v1293
    %v1483 = vadd.f32 %v1482, %v1299
    %v1484 = vadd.f32 %v1483, %v1303
    %v1485 = vadd.f32 %v1484, %v1309
    %v1486 = vadd.f32 %v1485, %v1313
    %v1487 = vadd.f32 %v1486, %v1319
    %v1488 = vadd.f32 %v1487, %v1323
    %v1489 = vadd.f32 %v1488, %v1329
    %v1490 = vadd.f32 %v1489, %v1333
    %v1491 = vadd.f32 %v1490, %v1339
    %v1492 = vadd.f32 %v1491, %v1343
    %v1493 = vadd.f32 %v1492, %v1349
    %v1494 = vadd.f32 %v1493, %v1353
    %v1495 = vadd.f32 %v1494, %v1359
    %v1496 = vadd.f32 %v1495, %v1363
    %v1497 = vadd.f32 %v1496, %v1369
    %v1498 = vadd.f32 %v1497, %v1373
    %v1499 = vadd.f32 %v1498, %v1379
    %v1500 = vadd.f32 %v1499, %v1383
    %v1501 = vadd.f32 %v1500, %v1389
    %v1502 = vadd.f32 %v1501, %v1393
    %v1503 = vadd.f32 %v1502, %v1399
    %v1504 = vadd.f32 %v1503, %v1403
    %v1505 = vadd.f32 %v1504, %v1409
    %v1506 = vadd.f32 %v1505, %v1413
    %v1507 = vadd.f32 %v1506, %v1419
    %v1508 = vadd.f32 %v1507, %v1423
    %v1509 = vadd.f32 %v1508, %v1429
    %v1510 = vadd.f32 %v1509, %v1433
    %v1511 = vadd.f32 %v1510, %v1439
    %v1512 = vadd.f32 %v1511, %v1443
    %v1513 = vrot.slane %v1512, 4
    %v1514 = vadd.f32 %v1512, %v1513
    %v1515 = vrot.slane %v1514, 2
    %v1516 = vadd.f32 %v1514, %v1515
    %v1517 = vrot.slane %v1516, 1
    %v1518 = vadd.f32 %v1516, %v1517
    %v1519 = vmul.f32 %v1481, %v607
    %v1520 = vmul.f32 %v1518, %v607
    %v1521 = vmul.f32 %v1287, %v1287
    %v1522 = vmul.f32 %v1289, %v1289
    %v1523 = vmul.f32 %v1291, %v1291
    %v1524 = vmul.f32 %v1293, %v1293
    %v1525 = vmul.f32 %v1297, %v1297
    %v1526 = vmul.f32 %v1299, %v1299
    %v1527 = vmul.f32 %v1301, %v1301
    %v1528 = vmul.f32 %v1303, %v1303
    %v1529 = vmul.f32 %v1307, %v1307
    %v1530 = vmul.f32 %v1309, %v1309
    %v1531 = vmul.f32 %v1311, %v1311
    %v1532 = vmul.f32 %v1313, %v1313
    %v1533 = vmul.f32 %v1317, %v1317
    %v1534 = vmul.f32 %v1319, %v1319
    %v1535 = vmul.f32 %v1321, %v1321
    %v1536 = vmul.f32 %v1323, %v1323
    %v1537 = vmul.f32 %v1327, %v1327
    %v1538 = vmul.f32 %v1329, %v1329
    %v1539 = vmul.f32 %v1331, %v1331
    %v1540 = vmul.f32 %v1333, %v1333
    %v1541 = vmul.f32 %v1337, %v1337
    %v1542 = vmul.f32 %v1339, %v1339
    %v1543 = vmul.f32 %v1341, %v1341
    %v1544 = vmul.f32 %v1343, %v1343
    %v1545 = vmul.f32 %v1347, %v1347
    %v1546 = vmul.f32 %v1349, %v1349
    %v1547 = vmul.f32 %v1351, %v1351
    %v1548 = vmul.f32 %v1353, %v1353
    %v1549 = vmul.f32 %v1357, %v1357
    %v1550 = vmul.f32 %v1359, %v1359
    %v1551 = vmul.f32 %v1361, %v1361
    %v1552 = vmul.f32 %v1363, %v1363
    %v1553 = vmul.f32 %v1367, %v1367
    %v1554 = vmul.f32 %v1369, %v1369
    %v1555 = vmul.f32 %v1371, %v1371
    %v1556 = vmul.f32 %v1373, %v1373
    %v1557 = vmul.f32 %v1377, %v1377
    %v1558 = vmul.f32 %v1379, %v1379
    %v1559 = vmul.f32 %v1381, %v1381
    %v1560 = vmul.f32 %v1383, %v1383
    %v1561 = vmul.f32 %v1387, %v1387
    %v1562 = vmul.f32 %v1389, %v1389
    %v1563 = vmul.f32 %v1391, %v1391
    %v1564 = vmul.f32 %v1393, %v1393
    %v1565 = vmul.f32 %v1397, %v1397
    %v1566 = vmul.f32 %v1399, %v1399
    %v1567 = vmul.f32 %v1401, %v1401
    %v1568 = vmul.f32 %v1403, %v1403
    %v1569 = vmul.f32 %v1407, %v1407
    %v1570 = vmul.f32 %v1409, %v1409
    %v1571 = vmul.f32 %v1411, %v1411
    %v1572 = vmul.f32 %v1413, %v1413
    %v1573 = vmul.f32 %v1417, %v1417
    %v1574 = vmul.f32 %v1419, %v1419
    %v1575 = vmul.f32 %v1421, %v1421
    %v1576 = vmul.f32 %v1423, %v1423
    %v1577 = vmul.f32 %v1427, %v1427
    %v1578 = vmul.f32 %v1429, %v1429
    %v1579 = vmul.f32 %v1431, %v1431
    %v1580 = vmul.f32 %v1433, %v1433
    %v1581 = vmul.f32 %v1437, %v1437
    %v1582 = vmul.f32 %v1439, %v1439
    %v1583 = vmul.f32 %v1441, %v1441
    %v1584 = vmul.f32 %v1443, %v1443
    %v1585 = vadd.f32 %v1521, %v1523
    %v1586 = vadd.f32 %v1585, %v1525
    %v1587 = vadd.f32 %v1586, %v1527
    %v1588 = vadd.f32 %v1587, %v1529
    %v1589 = vadd.f32 %v1588, %v1531
    %v1590 = vadd.f32 %v1589, %v1533
    %v1591 = vadd.f32 %v1590, %v1535
    %v1592 = vadd.f32 %v1591, %v1537
    %v1593 = vadd.f32 %v1592, %v1539
    %v1594 = vadd.f32 %v1593, %v1541
    %v1595 = vadd.f32 %v1594, %v1543
    %v1596 = vadd.f32 %v1595, %v1545
    %v1597 = vadd.f32 %v1596, %v1547
    %v1598 = vadd.f32 %v1597, %v1549
    %v1599 = vadd.f32 %v1598, %v1551
    %v1600 = vadd.f32 %v1599, %v1553
    %v1601 = vadd.f32 %v1600, %v1555
    %v1602 = vadd.f32 %v1601, %v1557
    %v1603 = vadd.f32 %v1602, %v1559
    %v1604 = vadd.f32 %v1603, %v1561
    %v1605 = vadd.f32 %v1604, %v1563
    %v1606 = vadd.f32 %v1605, %v1565
    %v1607 = vadd.f32 %v1606, %v1567
    %v1608 = vadd.f32 %v1607, %v1569
    %v1609 = vadd.f32 %v1608, %v1571
    %v1610 = vadd.f32 %v1609, %v1573
    %v1611 = vadd.f32 %v1610, %v1575
    %v1612 = vadd.f32 %v1611, %v1577
    %v1613 = vadd.f32 %v1612, %v1579
    %v1614 = vadd.f32 %v1613, %v1581
    %v1615 = vadd.f32 %v1614, %v1583
    %v1616 = vrot.slane %v1615, 4
    %v1617 = vadd.f32 %v1615, %v1616
    %v1618 = vrot.slane %v1617, 2
    %v1619 = vadd.f32 %v1617, %v1618
    %v1620 = vrot.slane %v1619, 1
    %v1621 = vadd.f32 %v1619, %v1620
    %v1622 = vadd.f32 %v1522, %v1524
    %v1623 = vadd.f32 %v1622, %v1526
    %v1624 = vadd.f32 %v1623, %v1528
    %v1625 = vadd.f32 %v1624, %v1530
    %v1626 = vadd.f32 %v1625, %v1532
    %v1627 = vadd.f32 %v1626, %v1534
    %v1628 = vadd.f32 %v1627, %v1536
    %v1629 = vadd.f32 %v1628, %v1538
    %v1630 = vadd.f32 %v1629, %v1540
    %v1631 = vadd.f32 %v1630, %v1542
    %v1632 = vadd.f32 %v1631, %v1544
    %v1633 = vadd.f32 %v1632, %v1546
    %v1634 = vadd.f32 %v1633, %v1548
    %v1635 = vadd.f32 %v1634, %v1550
    %v1636 = vadd.f32 %v1635, %v1552
    %v1637 = vadd.f32 %v1636, %v1554
    %v1638 = vadd.f32 %v1637, %v1556
    %v1639 = vadd.f32 %v1638, %v1558
    %v1640 = vadd.f32 %v1639, %v1560
    %v1641 = vadd.f32 %v1640, %v1562
    %v1642 = vadd.f32 %v1641, %v1564
    %v1643 = vadd.f32 %v1642, %v1566
    %v1644 = vadd.f32 %v1643, %v1568
    %v1645 = vadd.f32 %v1644, %v1570
    %v1646 = vadd.f32 %v1645, %v1572
    %v1647 = vadd.f32 %v1646, %v1574
    %v1648 = vadd.f32 %v1647, %v1576
    %v1649 = vadd.f32 %v1648, %v1578
    %v1650 = vadd.f32 %v1649, %v1580
    %v1651 = vadd.f32 %v1650, %v1582
    %v1652 = vadd.f32 %v1651, %v1584
    %v1653 = vrot.slane %v1652, 4
    %v1654 = vadd.f32 %v1652, %v1653
    %v1655 = vrot.slane %v1654, 2
    %v1656 = vadd.f32 %v1654, %v1655
    %v1657 = vrot.slane %v1656, 1
    %v1658 = vadd.f32 %v1656, %v1657
    %v1659 = vmul.f32 %v1621, %v607
    %v1660 = vmul.f32 %v1658, %v607
    %v1661 = vmul.f32 %v1519, %v1519
    %v1662 = vmul.f32 %v1520, %v1520
    %v1663 = vsub.f32 %v1659, %v1661
    %v1664 = vsub.f32 %v1660, %v1662
    %v1665 = vmax.f32 %v1663, 0.0
    %v1666 = vmax.f32 %v1664, 0.0
    %v1667 = vld [vmem:[%s7] sm:$0x3]
    %v1668 = vadd.f32 %v1665, 1e-05
    %v1669 = vadd.f32 %v1666, 1e-05
    %v1670 = vrsqrt.pop %v1668
    %v1671 = vrsqrt.pop %v1669
    %v1674 = vcombine.low %v1670, %v1671
    %v1676 = vunpack.c.l.s4 1966171168
    %v1677 = vunpack.c.0.s8 %v1676
    %v1678 = vlaneseq
    %v1679 = vshrl.u32 %v1678, 7
    %v1680 = vsub.s32 %v1677, %v1679
    %v1681 = vrot.slane %v1674, %v1680
    %v1683 = vunpack.c.l.s4 1966171168
    %v1684 = vunpack.c.0.s8 %v1683
    %v1685 = vlaneseq
    %v1686 = vshrl.u32 %v1685, 7
    %v1687 = vsub.s32 %v1684, %v1686
    %v1688 = vrot.slane %v1681, %v1687
    %v1690 = vmul.f32 %v1667, %v1688
    %v1691 = vld [vmem:[%s8] sm:$0x3]
    %v1693 = vlaneseq
    %v1694 = vshrl.u32 %v1693, 7
    %v1695 = vsub.s32 0, %v1694
    %v1696 = vrot.slane %v1690, %v1695
    %v1697 = vlaneseq
    %v1698 = vshrl.u32 %v1697, 7
    %v1699 = vsub.s32 1, %v1698
    %v1700 = vrot.slane %v1690, %v1699
    %v1703 = vmul.f32 %v1519, %v1696
    %v1704 = vmul.f32 %v1520, %v1700
    %v1707 = vcombine.low %v1703, %v1704
    %v1709 = vunpack.c.l.s4 1966171168
    %v1710 = vunpack.c.0.s8 %v1709
    %v1711 = vlaneseq
    %v1712 = vshrl.u32 %v1711, 7
    %v1713 = vsub.s32 %v1710, %v1712
    %v1714 = vrot.slane %v1707, %v1713
    %v1716 = vunpack.c.l.s4 1966171168
    %v1717 = vunpack.c.0.s8 %v1716
    %v1718 = vlaneseq
    %v1719 = vshrl.u32 %v1718, 7
    %v1720 = vsub.s32 %v1717, %v1719
    %v1721 = vrot.slane %v1714, %v1720
    %v1723 = vsub.f32 %v1691, %v1721
    %v1724 = vmul.f32 %v1287, %v1696
    %v1725 = vmul.f32 %v1289, %v1700
    %v1726 = vmul.f32 %v1291, %v1696
    %v1727 = vmul.f32 %v1293, %v1700
    %v1728 = vmul.f32 %v1297, %v1696
    %v1729 = vmul.f32 %v1299, %v1700
    %v1730 = vmul.f32 %v1301, %v1696
    %v1731 = vmul.f32 %v1303, %v1700
    %v1732 = vmul.f32 %v1307, %v1696
    %v1733 = vmul.f32 %v1309, %v1700
    %v1734 = vmul.f32 %v1311, %v1696
    %v1735 = vmul.f32 %v1313, %v1700
    %v1736 = vmul.f32 %v1317, %v1696
    %v1737 = vmul.f32 %v1319, %v1700
    %v1738 = vmul.f32 %v1321, %v1696
    %v1739 = vmul.f32 %v1323, %v1700
    %v1740 = vmul.f32 %v1327, %v1696
    %v1741 = vmul.f32 %v1329, %v1700
    %v1742 = vmul.f32 %v1331, %v1696
    %v1743 = vmul.f32 %v1333, %v1700
    %v1744 = vmul.f32 %v1337, %v1696
    %v1745 = vmul.f32 %v1339, %v1700
    %v1746 = vmul.f32 %v1341, %v1696
    %v1747 = vmul.f32 %v1343, %v1700
    %v1748 = vmul.f32 %v1347, %v1696
    %v1749 = vmul.f32 %v1349, %v1700
    %v1750 = vmul.f32 %v1351, %v1696
    %v1751 = vmul.f32 %v1353, %v1700
    %v1752 = vmul.f32 %v1357, %v1696
    %v1753 = vmul.f32 %v1359, %v1700
    %v1754 = vmul.f32 %v1361, %v1696
    %v1755 = vmul.f32 %v1363, %v1700
    %v1756 = vmul.f32 %v1367, %v1696
    %v1757 = vmul.f32 %v1369, %v1700
    %v1758 = vmul.f32 %v1371, %v1696
    %v1759 = vmul.f32 %v1373, %v1700
    %v1760 = vmul.f32 %v1377, %v1696
    %v1761 = vmul.f32 %v1379, %v1700
    %v1762 = vmul.f32 %v1381, %v1696
    %v1763 = vmul.f32 %v1383, %v1700
    %v1764 = vmul.f32 %v1387, %v1696
    %v1765 = vmul.f32 %v1389, %v1700
    %v1766 = vmul.f32 %v1391, %v1696
    %v1767 = vmul.f32 %v1393, %v1700
    %v1768 = vmul.f32 %v1397, %v1696
    %v1769 = vmul.f32 %v1399, %v1700
    %v1770 = vmul.f32 %v1401, %v1696
    %v1771 = vmul.f32 %v1403, %v1700
    %v1772 = vmul.f32 %v1407, %v1696
    %v1773 = vmul.f32 %v1409, %v1700
    %v1774 = vmul.f32 %v1411, %v1696
    %v1775 = vmul.f32 %v1413, %v1700
    %v1776 = vmul.f32 %v1417, %v1696
    %v1777 = vmul.f32 %v1419, %v1700
    %v1778 = vmul.f32 %v1421, %v1696
    %v1779 = vmul.f32 %v1423, %v1700
    %v1780 = vmul.f32 %v1427, %v1696
    %v1781 = vmul.f32 %v1429, %v1700
    %v1782 = vmul.f32 %v1431, %v1696
    %v1783 = vmul.f32 %v1433, %v1700
    %v1784 = vmul.f32 %v1437, %v1696
    %v1785 = vmul.f32 %v1439, %v1700
    %v1786 = vmul.f32 %v1441, %v1696
    %v1787 = vmul.f32 %v1443, %v1700
    %v1789 = vlaneseq
    %v1790 = vshrl.u32 %v1789, 7
    %v1791 = vsub.s32 0, %v1790
    %v1792 = vrot.slane %v1723, %v1791
    %v1793 = vlaneseq
    %v1794 = vshrl.u32 %v1793, 7
    %v1795 = vsub.s32 1, %v1794
    %v1796 = vrot.slane %v1723, %v1795
    %v1799 = vadd.f32 %v1724, %v1792
    %v1800 = vadd.f32 %v1725, %v1796
    %v1801 = vadd.f32 %v1726, %v1792
    %v1802 = vadd.f32 %v1727, %v1796
    %v1803 = vadd.f32 %v1728, %v1792
    %v1804 = vadd.f32 %v1729, %v1796
    %v1805 = vadd.f32 %v1730, %v1792
    %v1806 = vadd.f32 %v1731, %v1796
    %v1807 = vadd.f32 %v1732, %v1792
    %v1808 = vadd.f32 %v1733, %v1796
    %v1809 = vadd.f32 %v1734, %v1792
    %v1810 = vadd.f32 %v1735, %v1796
    %v1811 = vadd.f32 %v1736, %v1792
    %v1812 = vadd.f32 %v1737, %v1796
    %v1813 = vadd.f32 %v1738, %v1792
    %v1814 = vadd.f32 %v1739, %v1796
    %v1815 = vadd.f32 %v1740, %v1792
    %v1816 = vadd.f32 %v1741, %v1796
    %v1817 = vadd.f32 %v1742, %v1792
    %v1818 = vadd.f32 %v1743, %v1796
    %v1819 = vadd.f32 %v1744, %v1792
    %v1820 = vadd.f32 %v1745, %v1796
    %v1821 = vadd.f32 %v1746, %v1792
    %v1822 = vadd.f32 %v1747, %v1796
    %v1823 = vadd.f32 %v1748, %v1792
    %v1824 = vadd.f32 %v1749, %v1796
    %v1825 = vadd.f32 %v1750, %v1792
    %v1826 = vadd.f32 %v1751, %v1796
    %v1827 = vadd.f32 %v1752, %v1792
    %v1828 = vadd.f32 %v1753, %v1796
    %v1829 = vadd.f32 %v1754, %v1792
    %v1830 = vadd.f32 %v1755, %v1796
    %v1831 = vadd.f32 %v1756, %v1792
    %v1832 = vadd.f32 %v1757, %v1796
    %v1833 = vadd.f32 %v1758, %v1792
    %v1834 = vadd.f32 %v1759, %v1796
    %v1835 = vadd.f32 %v1760, %v1792
    %v1836 = vadd.f32 %v1761, %v1796
    %v1837 = vadd.f32 %v1762, %v1792
    %v1838 = vadd.f32 %v1763, %v1796
    %v1839 = vadd.f32 %v1764, %v1792
    %v1840 = vadd.f32 %v1765, %v1796
    %v1841 = vadd.f32 %v1766, %v1792
    %v1842 = vadd.f32 %v1767, %v1796
    %v1843 = vadd.f32 %v1768, %v1792
    %v1844 = vadd.f32 %v1769, %v1796
    %v1845 = vadd.f32 %v1770, %v1792
    %v1846 = vadd.f32 %v1771, %v1796
    %v1847 = vadd.f32 %v1772, %v1792
    %v1848 = vadd.f32 %v1773, %v1796
    %v1849 = vadd.f32 %v1774, %v1792
    %v1850 = vadd.f32 %v1775, %v1796
    %v1851 = vadd.f32 %v1776, %v1792
    %v1852 = vadd.f32 %v1777, %v1796
    %v1853 = vadd.f32 %v1778, %v1792
    %v1854 = vadd.f32 %v1779, %v1796
    %v1855 = vadd.f32 %v1780, %v1792
    %v1856 = vadd.f32 %v1781, %v1796
    %v1857 = vadd.f32 %v1782, %v1792
    %v1858 = vadd.f32 %v1783, %v1796
    %v1859 = vadd.f32 %v1784, %v1792
    %v1860 = vadd.f32 %v1785, %v1796
    %v1861 = vadd.f32 %v1786, %v1792
    %v1862 = vadd.f32 %v1787, %v1796
    %v1863 = vmax.f32 %v1799, 0.0
    %v1864 = vmax.f32 %v1800, 0.0
    %v1865 = vmax.f32 %v1801, 0.0
    %v1866 = vmax.f32 %v1802, 0.0
    %v1867 = vmax.f32 %v1803, 0.0
    %v1868 = vmax.f32 %v1804, 0.0
    %v1869 = vmax.f32 %v1805, 0.0
    %v1870 = vmax.f32 %v1806, 0.0
    %v1871 = vmax.f32 %v1807, 0.0
    %v1872 = vmax.f32 %v1808, 0.0
    %v1873 = vmax.f32 %v1809, 0.0
    %v1874 = vmax.f32 %v1810, 0.0
    %v1875 = vmax.f32 %v1811, 0.0
    %v1876 = vmax.f32 %v1812, 0.0
    %v1877 = vmax.f32 %v1813, 0.0
    %v1878 = vmax.f32 %v1814, 0.0
    %v1879 = vmax.f32 %v1815, 0.0
    %v1880 = vmax.f32 %v1816, 0.0
    %v1881 = vmax.f32 %v1817, 0.0
    %v1882 = vmax.f32 %v1818, 0.0
    %v1883 = vmax.f32 %v1819, 0.0
    %v1884 = vmax.f32 %v1820, 0.0
    %v1885 = vmax.f32 %v1821, 0.0
    %v1886 = vmax.f32 %v1822, 0.0
    %v1887 = vmax.f32 %v1823, 0.0
    %v1888 = vmax.f32 %v1824, 0.0
    %v1889 = vmax.f32 %v1825, 0.0
    %v1890 = vmax.f32 %v1826, 0.0
    %v1891 = vmax.f32 %v1827, 0.0
    %v1892 = vmax.f32 %v1828, 0.0
    %v1893 = vmax.f32 %v1829, 0.0
    %v1894 = vmax.f32 %v1830, 0.0
    %v1895 = vmax.f32 %v1831, 0.0
    %v1896 = vmax.f32 %v1832, 0.0
    %v1897 = vmax.f32 %v1833, 0.0
    %v1898 = vmax.f32 %v1834, 0.0
    %v1899 = vmax.f32 %v1835, 0.0
    %v1900 = vmax.f32 %v1836, 0.0
    %v1901 = vmax.f32 %v1837, 0.0
    %v1902 = vmax.f32 %v1838, 0.0
    %v1903 = vmax.f32 %v1839, 0.0
    %v1904 = vmax.f32 %v1840, 0.0
    %v1905 = vmax.f32 %v1841, 0.0
    %v1906 = vmax.f32 %v1842, 0.0
    %v1907 = vmax.f32 %v1843, 0.0
    %v1908 = vmax.f32 %v1844, 0.0
    %v1909 = vmax.f32 %v1845, 0.0
    %v1910 = vmax.f32 %v1846, 0.0
    %v1911 = vmax.f32 %v1847, 0.0
    %v1912 = vmax.f32 %v1848, 0.0
    %v1913 = vmax.f32 %v1849, 0.0
    %v1914 = vmax.f32 %v1850, 0.0
    %v1915 = vmax.f32 %v1851, 0.0
    %v1916 = vmax.f32 %v1852, 0.0
    %v1917 = vmax.f32 %v1853, 0.0
    %v1918 = vmax.f32 %v1854, 0.0
    %v1919 = vmax.f32 %v1855, 0.0
    %v1920 = vmax.f32 %v1856, 0.0
    %v1921 = vmax.f32 %v1857, 0.0
    %v1922 = vmax.f32 %v1858, 0.0
    %v1923 = vmax.f32 %v1859, 0.0
    %v1924 = vmax.f32 %v1860, 0.0
    %v1925 = vmax.f32 %v1861, 0.0
    %v1926 = vmax.f32 %v1862, 0.0
    %v1927 = vpack.c.bf16 %v1865, %v1863
    %v1928 = vpack.c.bf16 %v1866, %v1864
    %v1929 = vpack.c.bf16 %v1869, %v1867
    %v1930 = vpack.c.bf16 %v1870, %v1868
    %v1931 = vpack.c.bf16 %v1873, %v1871
    %v1932 = vpack.c.bf16 %v1874, %v1872
    %v1933 = vpack.c.bf16 %v1877, %v1875
    %v1934 = vpack.c.bf16 %v1878, %v1876
    %v1935 = vpack.c.bf16 %v1881, %v1879
    %v1936 = vpack.c.bf16 %v1882, %v1880
    %v1937 = vpack.c.bf16 %v1885, %v1883
    %v1938 = vpack.c.bf16 %v1886, %v1884
    %v1939 = vpack.c.bf16 %v1889, %v1887
    %v1940 = vpack.c.bf16 %v1890, %v1888
    %v1941 = vpack.c.bf16 %v1893, %v1891
    %v1942 = vpack.c.bf16 %v1894, %v1892
    %v1943 = vpack.c.bf16 %v1897, %v1895
    %v1944 = vpack.c.bf16 %v1898, %v1896
    %v1945 = vpack.c.bf16 %v1901, %v1899
    %v1946 = vpack.c.bf16 %v1902, %v1900
    %v1947 = vpack.c.bf16 %v1905, %v1903
    %v1948 = vpack.c.bf16 %v1906, %v1904
    %v1949 = vpack.c.bf16 %v1909, %v1907
    %v1950 = vpack.c.bf16 %v1910, %v1908
    %v1951 = vpack.c.bf16 %v1913, %v1911
    %v1952 = vpack.c.bf16 %v1914, %v1912
    %v1953 = vpack.c.bf16 %v1917, %v1915
    %v1954 = vpack.c.bf16 %v1918, %v1916
    %v1955 = vpack.c.bf16 %v1921, %v1919
    %v1956 = vpack.c.bf16 %v1922, %v1920
    %v1957 = vpack.c.bf16 %v1925, %v1923
    %v1958 = vpack.c.bf16 %v1926, %v1924
    %v1959 = vld [vmem:[%s9] sm:$0xf]
    %v1960 = vld [vmem:[%s9 + $0x4] sm:$0xf]
    %v1961 = vld [vmem:[%s9 + $0x8] sm:$0xf]
    %v1962 = vld [vmem:[%s9 + $0xc] sm:$0xf]
    %v1963 = vld [vmem:[%s9 + $0x10] sm:$0xf]
    %v1964 = vld [vmem:[%s9 + $0x14] sm:$0xf]
    %v1965 = vld [vmem:[%s9 + $0x18] sm:$0xf]
    %v1966 = vld [vmem:[%s9 + $0x1c] sm:$0xf]
    %v1967 = vld [vmem:[%s9 + $0x20] sm:$0xf]
    %v1968 = vld [vmem:[%s9 + $0x24] sm:$0xf]
    %v1969 = vld [vmem:[%s9 + $0x28] sm:$0xf]
    %v1970 = vld [vmem:[%s9 + $0x2c] sm:$0xf]
    %v1971 = vld [vmem:[%s9 + $0x30] sm:$0xf]
    %v1972 = vld [vmem:[%s9 + $0x34] sm:$0xf]
    %v1973 = vld [vmem:[%s9 + $0x38] sm:$0xf]
    %v1974 = vld [vmem:[%s9 + $0x3c] sm:$0xf]
    %v1975 = vld [vmem:[%s9 + $0x40] sm:$0xf]
    %v1976 = vld [vmem:[%s9 + $0x44] sm:$0xf]
    %v1977 = vld [vmem:[%s9 + $0x48] sm:$0xf]
    %v1978 = vld [vmem:[%s9 + $0x4c] sm:$0xf]
    %v1979 = vld [vmem:[%s9 + $0x50] sm:$0xf]
    %v1980 = vld [vmem:[%s9 + $0x54] sm:$0xf]
    %v1981 = vld [vmem:[%s9 + $0x58] sm:$0xf]
    %v1982 = vld [vmem:[%s9 + $0x5c] sm:$0xf]
    %v1983 = vld [vmem:[%s9 + $0x60] sm:$0xf]
    %v1984 = vld [vmem:[%s9 + $0x64] sm:$0xf]
    %v1985 = vld [vmem:[%s9 + $0x68] sm:$0xf]
    %v1986 = vld [vmem:[%s9 + $0x6c] sm:$0xf]
    %v1987 = vld [vmem:[%s9 + $0x70] sm:$0xf]
    %v1988 = vld [vmem:[%s9 + $0x74] sm:$0xf]
    %v1989 = vld [vmem:[%s9 + $0x78] sm:$0xf]
    %v1990 = vld [vmem:[%s9 + $0x7c] sm:$0xf]
    %v1991 = vld [vmem:[%s10] sm:$0x1]
    %v1993 = vlaneseq
    %v1994 = vshrl.u32 %v1993, 7
    %v1995 = vsub.s32 0, %v1994
    %v1996 = vrot.slane %v1991, %v1995
    %v2030 = vunpack.c.l.b16 %v1959
    %v2031 = vunpack.c.l.b16 %v1960
    %v2032 = vunpack.c.l.b16 %v1961
    %v2033 = vunpack.c.l.b16 %v1962
    %v2034 = vunpack.c.l.b16 %v1963
    %v2035 = vunpack.c.l.b16 %v1964
    %v2036 = vunpack.c.l.b16 %v1965
    %v2037 = vunpack.c.l.b16 %v1966
    %v2038 = vunpack.c.l.b16 %v1967
    %v2039 = vunpack.c.l.b16 %v1968
    %v2040 = vunpack.c.l.b16 %v1969
    %v2041 = vunpack.c.l.b16 %v1970
    %v2042 = vunpack.c.l.b16 %v1971
    %v2043 = vunpack.c.l.b16 %v1972
    %v2044 = vunpack.c.l.b16 %v1973
    %v2045 = vunpack.c.l.b16 %v1974
    %v2046 = vunpack.c.l.b16 %v1975
    %v2047 = vunpack.c.l.b16 %v1976
    %v2048 = vunpack.c.l.b16 %v1977
    %v2049 = vunpack.c.l.b16 %v1978
    %v2050 = vunpack.c.l.b16 %v1979
    %v2051 = vunpack.c.l.b16 %v1980
    %v2052 = vunpack.c.l.b16 %v1981
    %v2053 = vunpack.c.l.b16 %v1982
    %v2054 = vunpack.c.l.b16 %v1983
    %v2055 = vunpack.c.l.b16 %v1984
    %v2056 = vunpack.c.l.b16 %v1985
    %v2057 = vunpack.c.l.b16 %v1986
    %v2058 = vunpack.c.l.b16 %v1987
    %v2059 = vunpack.c.l.b16 %v1988
    %v2060 = vunpack.c.l.b16 %v1989
    %v2061 = vunpack.c.l.b16 %v1990
    %v2062 = vpack.c.b16 %v2031, %v2030
    %v2063 = vpack.c.b16 %v2033, %v2032
    %v2064 = vpack.c.b16 %v2035, %v2034
    %v2065 = vpack.c.b16 %v2037, %v2036
    %v2066 = vpack.c.b16 %v2039, %v2038
    %v2067 = vpack.c.b16 %v2041, %v2040
    %v2068 = vpack.c.b16 %v2043, %v2042
    %v2069 = vpack.c.b16 %v2045, %v2044
    %v2070 = vpack.c.b16 %v2047, %v2046
    %v2071 = vpack.c.b16 %v2049, %v2048
    %v2072 = vpack.c.b16 %v2051, %v2050
    %v2073 = vpack.c.b16 %v2053, %v2052
    %v2074 = vpack.c.b16 %v2055, %v2054
    %v2075 = vpack.c.b16 %v2057, %v2056
    %v2076 = vpack.c.b16 %v2059, %v2058
    %v2077 = vpack.c.b16 %v2061, %v2060
    %2094 = vmatprep.subr.bf16.mxu0 0
    %2095 = vmatpush1.bf16.msra.mxu0 %v2069
    %2096 = vmatprep.subr.bf16.mxu0 0
    %2097 = vmatpush1.bf16.msra.mxu0 %v2068
    %2098 = vmatprep.subr.bf16.mxu0 0
    %2099 = vmatpush1.bf16.msra.mxu0 %v2067
    %2100 = vmatprep.subr.bf16.mxu0 0
    %2101 = vmatpush1.bf16.msra.mxu0 %v2066
    %2102 = vmatprep.subr.bf16.mxu0 0
    %2103 = vmatpush1.bf16.msra.mxu0 %v2065
    %2104 = vmatprep.subr.bf16.mxu0 0
    %2105 = vmatpush1.bf16.msra.mxu0 %v2064
    %2106 = vmatprep.subr.bf16.mxu0 0
    %2107 = vmatpush1.bf16.msra.mxu0 %v2063
    %2108 = vmatprep.subr.bf16.mxu0 0
    %2109 = vmatpush1.bf16.msra.mxu0 %v2062
    %2110 = vmatprep.subr.bf16.mxu0 0
    %2111 = vmatpush2.bf16.msra.mxu0 %v2077
    %2112 = vmatprep.subr.bf16.mxu0 0
    %2113 = vmatpush2.bf16.msra.mxu0 %v2076
    %2114 = vmatprep.subr.bf16.mxu0 0
    %2115 = vmatpush2.bf16.msra.mxu0 %v2075
    %2116 = vmatprep.subr.bf16.mxu0 0
    %2117 = vmatpush2.bf16.msra.mxu0 %v2074
    %2118 = vmatprep.subr.bf16.mxu0 0
    %2119 = vmatpush2.bf16.msra.mxu0 %v2073
    %2120 = vmatprep.subr.bf16.mxu0 0
    %2121 = vmatpush2.bf16.msra.mxu0 %v2072
    %2122 = vmatprep.subr.bf16.mxu0 0
    %2123 = vmatpush2.bf16.msra.mxu0 %v2071
    %2124 = vmatprep.subr.bf16.mxu0 0
    %2125 = vmatpush2.bf16.msra.mxu0 %v2070
    %2126 = vmatprep.mubr.bf16.mxu0 %v1928
    %2127 = vmatmul.mubr.bf16.gmra.mxu0 %v1927
    %v2128 = vpop.f32.mrf.mxu0
    %v2129 = vadd.f32 %v1996, %v2128
    %v2130 = vpop.f32.mrf.mxu0
    %v2131 = vpop.f32.mrf.mxu0
    %v2132 = vadd.f32 %v1996, %v2131
    %v2133 = vpop.f32.mrf.mxu0
    %2134 = vmatprep.mubr.bf16.mxu0 %v1930
    %2135 = vmatmul.mubr.bf16.gmra.mxu0 %v1929
    %v2136 = vpop.f32.mrf.mxu0
    %v2137 = vadd.f32 %v1996, %v2136
    %v2138 = vpop.f32.mrf.mxu0
    %v2139 = vpop.f32.mrf.mxu0
    %v2140 = vadd.f32 %v1996, %v2139
    %v2141 = vpop.f32.mrf.mxu0
    %2142 = vmatprep.mubr.bf16.mxu0 %v1932
    %2143 = vmatmul.mubr.bf16.gmra.mxu0 %v1931
    %v2144 = vpop.f32.mrf.mxu0
    %v2145 = vadd.f32 %v1996, %v2144
    %v2146 = vpop.f32.mrf.mxu0
    %v2147 = vpop.f32.mrf.mxu0
    %v2148 = vadd.f32 %v1996, %v2147
    %v2149 = vpop.f32.mrf.mxu0
    %2150 = vmatprep.mubr.bf16.mxu0 %v1934
    %2151 = vmatmul.mubr.bf16.gmra.mxu0 %v1933
    %v2152 = vpop.f32.mrf.mxu0
    %v2153 = vadd.f32 %v1996, %v2152
    %v2154 = vpop.f32.mrf.mxu0
    %v2155 = vpop.f32.mrf.mxu0
    %v2156 = vadd.f32 %v1996, %v2155
    %v2157 = vpop.f32.mrf.mxu0
    %2158 = vmatprep.mubr.bf16.mxu0 %v1936
    %2159 = vmatmul.mubr.bf16.gmra.mxu0 %v1935
    %v2160 = vpop.f32.mrf.mxu0
    %v2161 = vadd.f32 %v1996, %v2160
    %v2162 = vpop.f32.mrf.mxu0
    %v2163 = vpop.f32.mrf.mxu0
    %v2164 = vadd.f32 %v1996, %v2163
    %v2165 = vpop.f32.mrf.mxu0
    %2166 = vmatprep.mubr.bf16.mxu0 %v1938
    %2167 = vmatmul.mubr.bf16.gmra.mxu0 %v1937
    %v2168 = vpop.f32.mrf.mxu0
    %v2169 = vadd.f32 %v1996, %v2168
    %v2170 = vpop.f32.mrf.mxu0
    %v2171 = vpop.f32.mrf.mxu0
    %v2172 = vadd.f32 %v1996, %v2171
    %v2173 = vpop.f32.mrf.mxu0
    %2174 = vmatprep.mubr.bf16.mxu0 %v1940
    %2175 = vmatmul.mubr.bf16.gmra.mxu0 %v1939
    %v2176 = vpop.f32.mrf.mxu0
    %v2177 = vadd.f32 %v1996, %v2176
    %v2178 = vpop.f32.mrf.mxu0
    %v2179 = vpop.f32.mrf.mxu0
    %v2180 = vadd.f32 %v1996, %v2179
    %v2181 = vpop.f32.mrf.mxu0
    %2182 = vmatprep.mubr.bf16.mxu0 %v1942
    %2183 = vmatmul.mubr.bf16.gmra.mxu0 %v1941
    %v2184 = vpop.f32.mrf.mxu0
    %v2185 = vadd.f32 %v1996, %v2184
    %v2186 = vpop.f32.mrf.mxu0
    %v2187 = vpop.f32.mrf.mxu0
    %v2188 = vadd.f32 %v1996, %v2187
    %v2189 = vpop.f32.mrf.mxu0
    %2190 = vmatprep.mubr.bf16.mxu0 %v1944
    %2191 = vmatmul.mubr.bf16.gmra.mxu0 %v1943
    %v2192 = vpop.f32.mrf.mxu0
    %v2193 = vadd.f32 %v1996, %v2192
    %v2194 = vpop.f32.mrf.mxu0
    %v2195 = vpop.f32.mrf.mxu0
    %v2196 = vadd.f32 %v1996, %v2195
    %v2197 = vpop.f32.mrf.mxu0
    %2198 = vmatprep.mubr.bf16.mxu0 %v1946
    %2199 = vmatmul.mubr.bf16.gmra.mxu0 %v1945
    %v2200 = vpop.f32.mrf.mxu0
    %v2201 = vadd.f32 %v1996, %v2200
    %v2202 = vpop.f32.mrf.mxu0
    %v2203 = vpop.f32.mrf.mxu0
    %v2204 = vadd.f32 %v1996, %v2203
    %v2205 = vpop.f32.mrf.mxu0
    %2206 = vmatprep.mubr.bf16.mxu0 %v1948
    %2207 = vmatmul.mubr.bf16.gmra.mxu0 %v1947
    %v2208 = vpop.f32.mrf.mxu0
    %v2209 = vadd.f32 %v1996, %v2208
    %v2210 = vpop.f32.mrf.mxu0
    %v2211 = vpop.f32.mrf.mxu0
    %v2212 = vadd.f32 %v1996, %v2211
    %v2213 = vpop.f32.mrf.mxu0
    %2214 = vmatprep.mubr.bf16.mxu0 %v1950
    %2215 = vmatmul.mubr.bf16.gmra.mxu0 %v1949
    %v2216 = vpop.f32.mrf.mxu0
    %v2217 = vadd.f32 %v1996, %v2216
    %v2218 = vpop.f32.mrf.mxu0
    %v2219 = vpop.f32.mrf.mxu0
    %v2220 = vadd.f32 %v1996, %v2219
    %v2221 = vpop.f32.mrf.mxu0
    %2222 = vmatprep.mubr.bf16.mxu0 %v1952
    %2223 = vmatmul.mubr.bf16.gmra.mxu0 %v1951
    %v2224 = vpop.f32.mrf.mxu0
    %v2225 = vadd.f32 %v1996, %v2224
    %v2226 = vpop.f32.mrf.mxu0
    %v2227 = vpop.f32.mrf.mxu0
    %v2228 = vadd.f32 %v1996, %v2227
    %v2229 = vpop.f32.mrf.mxu0
    %2230 = vmatprep.mubr.bf16.mxu0 %v1954
    %2231 = vmatmul.mubr.bf16.gmra.mxu0 %v1953
    %v2232 = vpop.f32.mrf.mxu0
    %v2233 = vadd.f32 %v1996, %v2232
    %v2234 = vpop.f32.mrf.mxu0
    %v2235 = vpop.f32.mrf.mxu0
    %v2236 = vadd.f32 %v1996, %v2235
    %v2237 = vpop.f32.mrf.mxu0
    %2238 = vmatprep.mubr.bf16.mxu0 %v1956
    %2239 = vmatmul.mubr.bf16.gmra.mxu0 %v1955
    %v2240 = vpop.f32.mrf.mxu0
    %v2241 = vadd.f32 %v1996, %v2240
    %v2242 = vpop.f32.mrf.mxu0
    %v2243 = vpop.f32.mrf.mxu0
    %v2244 = vadd.f32 %v1996, %v2243
    %v2245 = vpop.f32.mrf.mxu0
    %2246 = vmatprep.mubr.bf16.mxu0 %v1958
    %2247 = vmatmul.mubr.bf16.gmra.mxu0 %v1957
    %v2248 = vpop.f32.mrf.mxu0
    %v2249 = vadd.f32 %v1996, %v2248
    %v2250 = vpop.f32.mrf.mxu0
    %v2251 = vpop.f32.mrf.mxu0
    %v2252 = vadd.f32 %v1996, %v2251
    %v2253 = vpop.f32.mrf.mxu0
    %2254 = vdwg.mxu0
    %2255 = vst [vmem:[#allocation2] sm:$0xff] %v2129
    %2256 = vst [vmem:[#allocation2 + $0x8] sm:$0xff] %v2132
    %2257 = vst [vmem:[#allocation2 + $0x10] sm:$0xff] %v2137
    %2258 = vst [vmem:[#allocation2 + $0x18] sm:$0xff] %v2140
    %2259 = vst [vmem:[#allocation2 + $0x20] sm:$0xff] %v2145
    %2260 = vst [vmem:[#allocation2 + $0x28] sm:$0xff] %v2148
    %2261 = vst [vmem:[#allocation2 + $0x30] sm:$0xff] %v2153
    %2262 = vst [vmem:[#allocation2 + $0x38] sm:$0xff] %v2156
    %2263 = vst [vmem:[#allocation2 + $0x40] sm:$0xff] %v2161
    %2264 = vst [vmem:[#allocation2 + $0x48] sm:$0xff] %v2164
    %2265 = vst [vmem:[#allocation2 + $0x50] sm:$0xff] %v2169
    %2266 = vst [vmem:[#allocation2 + $0x58] sm:$0xff] %v2172
    %2267 = vst [vmem:[#allocation2 + $0x60] sm:$0xff] %v2177
    %2268 = vst [vmem:[#allocation2 + $0x68] sm:$0xff] %v2180
    %2269 = vst [vmem:[#allocation2 + $0x70] sm:$0xff] %v2185
    %2270 = vst [vmem:[#allocation2 + $0x78] sm:$0xff] %v2188
    %2271 = vst [vmem:[#allocation2 + $0x80] sm:$0xff] %v2193
    %2272 = vst [vmem:[#allocation2 + $0x88] sm:$0xff] %v2196
    %2273 = vst [vmem:[#allocation2 + $0x90] sm:$0xff] %v2201
    %2274 = vst [vmem:[#allocation2 + $0x98] sm:$0xff] %v2204
    %2275 = vst [vmem:[#allocation2 + $0xa0] sm:$0xff] %v2209
    %2276 = vst [vmem:[#allocation2 + $0xa8] sm:$0xff] %v2212
    %2277 = vst [vmem:[#allocation2 + $0xb0] sm:$0xff] %v2217
    %2278 = vst [vmem:[#allocation2 + $0xb8] sm:$0xff] %v2220
    %2279 = vst [vmem:[#allocation2 + $0xc0] sm:$0xff] %v2225
    %2280 = vst [vmem:[#allocation2 + $0xc8] sm:$0xff] %v2228
    %2281 = vst [vmem:[#allocation2 + $0xd0] sm:$0xff] %v2233
    %2282 = vst [vmem:[#allocation2 + $0xd8] sm:$0xff] %v2236
    %2283 = vst [vmem:[#allocation2 + $0xe0] sm:$0xff] %v2241
    %2284 = vst [vmem:[#allocation2 + $0xe8] sm:$0xff] %v2244
    %2285 = vst [vmem:[#allocation2 + $0xf0] sm:$0xff] %v2249
    %2286 = vst [vmem:[#allocation2 + $0xf8] sm:$0xff] %v2252
    // Predicated region
    $region46: #{mlp_forward.1} parent=1 // pred_check
      _
    $region47: #{mlp_forward.1} parent=1 // pred_check_branch
      %2288 = sbr.rel (0) target = $region49
    $region48: #{mlp_forward.1} parent=1 // pred_region
      %s2290 = ssub.s32 4096, 4096
      %2291 = vsyncadd [#allocation3], %s2290
      %s2292 = sshll.u32 [#allocation2], 4
      %s2293 = int_to_ptr.vmem [resolvable:$true] %s2292
      %2298 = dma.vmem_to_hbm [thread:$0]  %s2293, 4096, %s11, [#allocation3], 128, 128, 8
    $region49: #{mlp_forward.1} parent=1 // pred_fallthru
      _
    // Predicated region
    $region50: #{mlp_forward.1} parent=1 // pred_check
      _
    $region51: #{mlp_forward.1} parent=1 // pred_check_branch
      %2300 = sbr.rel (0) target = $region53
    $region52: #{mlp_forward.1} parent=1 // pred_region
      %2301 = dma.done [#allocation3], 4096
    $region53: #{mlp_forward.1} parent=1 // pred_fallthru
      _
    %2302 = vsyncpa [#allocation3], 1

</llo_original>
